<compile_context>
chip_gen: v7x
topology: tpu7x:2x2x1
jax: 0.10.0
libtpu: 0.0.40
codegen_flags: <defaults>
</compile_context>

<pallas_src>
import math

import jax
import jax.numpy as jnp
from jax.experimental import pallas as pl
from jax.experimental.pallas import tpu as pltpu


def _round_up(x: int, m: int) -> int:
    return ((x + m - 1) // m) * m


def _choose_tile(S: int, tile_s: int) -> int:
    """Lane tile: a multiple of 128 and, when S allows it, small enough that the
    grid has >= 2 steps so dimension_semantics=('parallel',) can shard the S
    axis across both TensorCores on v7x (no-op on v5e/v6e)."""
    tile_s = max(128, _round_up(tile_s, 128))
    if S <= 128:
        return 128
    half = _round_up(pl.cdiv(S, 2), 128)
    return min(tile_s, half)


def _make_inr_kernel(n_layers: int, activation):
    """Fused MLP kernel. Refs: (x[I,ts], w0[h0,I], b0[h0,1], ..., out[O,ts])."""

    def kernel(*refs):
        x_ref = refs[0]
        o_ref = refs[-1]
        param_refs = refs[1:-1]                      # alternating (w_i, b_i)

        h = x_ref[...].astype(jnp.float32)           # [n_in, tile_s]
        for i in range(n_layers):
            w_ref = param_refs[2 * i]                # [n_out, n_in] (f32 or bf16)
            b_ref = param_refs[2 * i + 1]            # [n_out, 1]    (f32)
            # MXU matmul; operands may be bf16, accumulation stays f32.
            h = jnp.dot(w_ref[...], h.astype(w_ref.dtype),
                        preferred_element_type=jnp.float32)
            h = h + b_ref[...].astype(jnp.float32)   # lane-broadcast bias add (VPU)
            if i != n_layers - 1:
                h = activation(h)
        o_ref[...] = h.astype(o_ref.dtype)           # lane-dense store

    return kernel


def _build_and_call(xT, flat_params, *, n_layers, I, O, tile, S_pad, out_dtype,
                    activation, single_buffer_params, cost):
    kernel = _make_inr_kernel(n_layers, activation)

    # Weights/biases are grid-invariant (index_map == (0, 0)); hold them in a
    # single resident VMEM buffer instead of double-buffering them.
    wb_kwargs = dict(pipeline_mode=pl.Buffered(1)) if single_buffer_params else {}

    in_specs = [pl.BlockSpec((I, tile), lambda i: (0, i))]
    for li in range(n_layers):
        w = flat_params[2 * li]
        b = flat_params[2 * li + 1]
        in_specs.append(pl.BlockSpec(w.shape, lambda i: (0, 0), **wb_kwargs))
        in_specs.append(pl.BlockSpec(b.shape, lambda i: (0, 0), **wb_kwargs))
    out_spec = pl.BlockSpec((O, tile), lambda i: (0, i))

    return pl.pallas_call(
        kernel,
        out_shape=jax.ShapeDtypeStruct((O, S_pad), out_dtype),
        grid_spec=pltpu.PrefetchScalarGridSpec(
            num_scalar_prefetch=0,
            grid=(S_pad // tile,),
            in_specs=in_specs,
            out_specs=out_spec,
        ),
        compiler_params=pltpu.CompilerParams(
            dimension_semantics=("parallel",),
        ),
        cost_estimate=cost,
    )(xT, *flat_params)


def inr_forward(x, weights, biases, *, tile_s=512, use_bf16=False,
                activation=lambda h: jnp.maximum(h, 0.0)):
    """INR-mode forward.

    x:          [S, I] input coordinates / audio sample positions.
    weights[i]: [n_out_i, n_in_i] (PyTorch layout, NOT transposed).
    biases[i]:  [n_out_i].
    Returns [S, O] in x.dtype.
    """
    S, I = x.shape
    n_layers = len(weights)
    O = weights[-1].shape[0]

    tile = _choose_tile(S, tile_s)
    S_pad = _round_up(S, tile)                       # masked-free tail via padding

    # Layout plumbing (outside the kernel): sequence axis onto lanes, pad tail.
    xT = jnp.transpose(x)                            # [I, S]
    if S_pad != S:
        xT = jnp.pad(xT, ((0, 0), (0, S_pad - S)))

    flat_params = []
    for w, b in zip(weights, biases):
        wk = w.astype(jnp.bfloat16) if use_bf16 else w   # MXU operand dtype
        bk = b.reshape(-1, 1).astype(jnp.float32)        # elementwise stays f32
        flat_params.extend([wk, bk])

    flops = 2 * S_pad * sum(int(w.shape[0]) * int(w.shape[1]) for w in weights)
    bytes_accessed = (
        int(xT.size) * xT.dtype.itemsize
        + sum(int(p.size) * p.dtype.itemsize for p in flat_params)
        + S_pad * O * jnp.dtype(x.dtype).itemsize
    )
    cost = pl.CostEstimate(flops=flops, transcendentals=0,
                           bytes_accessed=bytes_accessed)

    kwargs = dict(n_layers=n_layers, I=I, O=O, tile=tile, S_pad=S_pad,
                  out_dtype=x.dtype, activation=activation, cost=cost)
    try:
        outT = _build_and_call(xT, flat_params, single_buffer_params=True, **kwargs)
        outT = jax.block_until_ready(outT)
    except Exception:
        # pl.Buffered(1) not supported by this jax version -> default buffering.
        outT = _build_and_call(xT, flat_params, single_buffer_params=False, **kwargs)

    return jnp.transpose(outT[:, :S])                # [S, O]


def init_inr_params(key, input_size, output_size, hidden_sizes):
    """Matches nn.init.kaiming_uniform_(a=sqrt(5)) + the uniform bias init."""
    dims_in = [input_size] + hidden_sizes
    dims_out = hidden_sizes + [output_size]
    weights, biases = [], []
    for n_in, n_out in zip(dims_in, dims_out):
        key, kw, kb = jax.random.split(key, 3)
        bound = 1.0 / math.sqrt(n_in)    # gain*sqrt(3/fan_in) with a=sqrt(5)
        weights.append(jax.random.uniform(kw, (n_out, n_in), jnp.float32,
                                          -bound, bound))
        biases.append(jax.random.uniform(kb, (n_out,), jnp.float32,
                                         -bound, bound))
    return weights, biases


def inr_reference(x, weights, biases, activation=lambda h: jnp.maximum(h, 0.0)):
    h = x
    n_layers = len(weights)
    for i, (w, b) in enumerate(zip(weights, biases)):
        h = h @ w.T + b
        if i != n_layers - 1:
            h = activation(h)
    return h


if __name__ == "__main__":
    # Small INR: coords -> 32 -> 32 -> output (INR mode, weights=None).
    input_size, output_size = 4, 4
    hidden_sizes = [32, 32]
    S = 384          # deliberately NOT a multiple of the chosen tile -> exercises padding

    key = jax.random.PRNGKey(0)
    key, kx = jax.random.split(key)
    x = jax.random.normal(kx, (S, input_size), jnp.float32)
    weights, biases = init_inr_params(key, input_size, output_size, hidden_sizes)

    ref = inr_reference(x, weights, biases)

    # f32-operand path.
    out = inr_forward(x, weights, biases, tile_s=512, use_bf16=False)
    out = jax.block_until_ready(out)
    assert out.shape == (S, output_size)
    assert jnp.allclose(out, ref, atol=1e-4, rtol=1e-4), "f32 mismatch vs reference"

    # bf16-operand / f32-accumulation path (v6e/v7x MXU-friendly).
    out_bf16 = inr_forward(x, weights, biases, tile_s=512, use_bf16=True)
    out_bf16 = jax.block_until_ready(out_bf16)
    assert jnp.allclose(out_bf16, ref, atol=5e-2, rtol=5e-2), "bf16 mismatch vs reference"

    # TODO(synk): TARGET_NETWORK / RESIDUAL / MODULATOR batched per-sample-weight
    # modes (torch.bmm) and the return_activations path are not implemented here.
    print("KERNEL_OK")
</pallas_src>

<mosaic_0001>
module attributes {stable_mosaic.version = 11 : i64} {
  func.func @kernel(%arg0: i32, %arg1: memref<4x256xf32, #tpu.memory_space<vmem>>, %arg2: memref<32x4xf32, #tpu.memory_space<vmem>>, %arg3: memref<32x1xf32, #tpu.memory_space<vmem>>, %arg4: memref<32x32xf32, #tpu.memory_space<vmem>>, %arg5: memref<32x1xf32, #tpu.memory_space<vmem>>, %arg6: memref<4x32xf32, #tpu.memory_space<vmem>>, %arg7: memref<4x1xf32, #tpu.memory_space<vmem>>, %arg8: memref<4x256xf32, #tpu.memory_space<vmem>>) attributes {dimension_semantics = [#tpu.dimension_semantics<parallel>], iteration_bounds = array<i64: 2>, scalar_prefetch = 0 : i64, scratch_operands = 0 : i64, tpu.core_type = #tpu.core_type<tc>, window_params = [{transform_indices = @transform_0, window_bounds = array<i64: 4, 256>}, {pipeline_mode = #tpu.pipeline_mode<synchronous>, transform_indices = @transform_1, window_bounds = array<i64: 32, 4>}, {pipeline_mode = #tpu.pipeline_mode<synchronous>, transform_indices = @transform_2, window_bounds = array<i64: 32, 1>}, {pipeline_mode = #tpu.pipeline_mode<synchronous>, transform_indices = @transform_3, window_bounds = array<i64: 32, 32>}, {pipeline_mode = #tpu.pipeline_mode<synchronous>, transform_indices = @transform_4, window_bounds = array<i64: 32, 1>}, {pipeline_mode = #tpu.pipeline_mode<synchronous>, transform_indices = @transform_5, window_bounds = array<i64: 4, 32>}, {pipeline_mode = #tpu.pipeline_mode<synchronous>, transform_indices = @transform_6, window_bounds = array<i64: 4, 1>}, {transform_indices = @transform_7, window_bounds = array<i64: 4, 256>}]} {
    %c0 = arith.constant 0 : index
    %c0_0 = arith.constant 0 : index
    %0 = vector.load %arg1[%c0, %c0_0] : memref<4x256xf32, #tpu.memory_space<vmem>>, vector<4x256xf32>
    %c0_1 = arith.constant 0 : index
    %c0_2 = arith.constant 0 : index
    %1 = vector.load %arg2[%c0_1, %c0_2] : memref<32x4xf32, #tpu.memory_space<vmem>>, vector<32x4xf32>
    %cst = arith.constant dense<0.000000e+00> : vector<32x256xf32>
    %2 = tpu.matmul %1, %0, %cst {dimension_numbers = #tpu.dot_dimension_numbers<[1], [0], [0], [1], [0, 0, 1, 1], [], []>} : vector<32x4xf32>, vector<4x256xf32>, vector<32x256xf32> -> vector<32x256xf32>
    %c0_3 = arith.constant 0 : index
    %c0_4 = arith.constant 0 : index
    %3 = vector.load %arg3[%c0_3, %c0_4] : memref<32x1xf32, #tpu.memory_space<vmem>>, vector<32x1xf32>
    %4 = vector.broadcast %3 : vector<32x1xf32> to vector<32x256xf32>
    %5 = arith.addf %2, %4 : vector<32x256xf32>
    %cst_5 = arith.constant 0.000000e+00 : f32
    %6 = vector.broadcast %cst_5 : f32 to vector<32x256xf32>
    %7 = arith.maximumf %5, %6 : vector<32x256xf32>
    %c0_6 = arith.constant 0 : index
    %c0_7 = arith.constant 0 : index
    %8 = vector.load %arg4[%c0_6, %c0_7] : memref<32x32xf32, #tpu.memory_space<vmem>>, vector<32x32xf32>
    %cst_8 = arith.constant dense<0.000000e+00> : vector<32x256xf32>
    %9 = tpu.matmul %8, %7, %cst_8 {dimension_numbers = #tpu.dot_dimension_numbers<[1], [0], [0], [1], [0, 0, 1, 1], [], []>} : vector<32x32xf32>, vector<32x256xf32>, vector<32x256xf32> -> vector<32x256xf32>
    %c0_9 = arith.constant 0 : index
    %c0_10 = arith.constant 0 : index
    %10 = vector.load %arg5[%c0_9, %c0_10] : memref<32x1xf32, #tpu.memory_space<vmem>>, vector<32x1xf32>
    %11 = vector.broadcast %10 : vector<32x1xf32> to vector<32x256xf32>
    %12 = arith.addf %9, %11 : vector<32x256xf32>
    %cst_11 = arith.constant 0.000000e+00 : f32
    %13 = vector.broadcast %cst_11 : f32 to vector<32x256xf32>
    %14 = arith.maximumf %12, %13 : vector<32x256xf32>
    %c0_12 = arith.constant 0 : index
    %c0_13 = arith.constant 0 : index
    %15 = vector.load %arg6[%c0_12, %c0_13] : memref<4x32xf32, #tpu.memory_space<vmem>>, vector<4x32xf32>
    %cst_14 = arith.constant dense<0.000000e+00> : vector<4x256xf32>
    %16 = tpu.matmul %15, %14, %cst_14 {dimension_numbers = #tpu.dot_dimension_numbers<[1], [0], [0], [1], [0, 0, 1, 1], [], []>} : vector<4x32xf32>, vector<32x256xf32>, vector<4x256xf32> -> vector<4x256xf32>
    %c0_15 = arith.constant 0 : index
    %c0_16 = arith.constant 0 : index
    %17 = vector.load %arg7[%c0_15, %c0_16] : memref<4x1xf32, #tpu.memory_space<vmem>>, vector<4x1xf32>
    %18 = vector.broadcast %17 : vector<4x1xf32> to vector<4x256xf32>
    %19 = arith.addf %16, %18 : vector<4x256xf32>
    %c0_17 = arith.constant 0 : index
    %c0_18 = arith.constant 0 : index
    %20 = vector.load %arg8[%c0_17, %c0_18] : memref<4x256xf32, #tpu.memory_space<vmem>>, vector<4x256xf32>
    tpu.vector_store %arg8[%c0_17, %c0_18], %19 {strides = array<i32>} : memref<4x256xf32, #tpu.memory_space<vmem>>, vector<4x256xf32>,
    return
  }
  func.func @transform_0(%arg0: i32) -> (i32, i32) {
    %c0_i32 = arith.constant 0 : i32
    %c0_i32_0 = arith.constant 0 : i32
    return %c0_i32, %arg0 : i32, i32
  }
  func.func @transform_1(%arg0: i32) -> (i32, i32) {
    %c0_i32 = arith.constant 0 : i32
    %c0_i32_0 = arith.constant 0 : i32
    %c0_i32_1 = arith.constant 0 : i32
    return %c0_i32, %c0_i32_0 : i32, i32
  }
  func.func @transform_2(%arg0: i32) -> (i32, i32) {
    %c0_i32 = arith.constant 0 : i32
    %c0_i32_0 = arith.constant 0 : i32
    %c0_i32_1 = arith.constant 0 : i32
    return %c0_i32, %c0_i32_0 : i32, i32
  }
  func.func @transform_3(%arg0: i32) -> (i32, i32) {
    %c0_i32 = arith.constant 0 : i32
    %c0_i32_0 = arith.constant 0 : i32
    %c0_i32_1 = arith.constant 0 : i32
    return %c0_i32, %c0_i32_0 : i32, i32
  }
  func.func @transform_4(%arg0: i32) -> (i32, i32) {
    %c0_i32 = arith.constant 0 : i32
    %c0_i32_0 = arith.constant 0 : i32
    %c0_i32_1 = arith.constant 0 : i32
    return %c0_i32, %c0_i32_0 : i32, i32
  }
  func.func @transform_5(%arg0: i32) -> (i32, i32) {
    %c0_i32 = arith.constant 0 : i32
    %c0_i32_0 = arith.constant 0 : i32
    %c0_i32_1 = arith.constant 0 : i32
    return %c0_i32, %c0_i32_0 : i32, i32
  }
  func.func @transform_6(%arg0: i32) -> (i32, i32) {
    %c0_i32 = arith.constant 0 : i32
    %c0_i32_0 = arith.constant 0 : i32
    %c0_i32_1 = arith.constant 0 : i32
    return %c0_i32, %c0_i32_0 : i32, i32
  }
  func.func @transform_7(%arg0: i32) -> (i32, i32) {
    %c0_i32 = arith.constant 0 : i32
    %c0_i32_0 = arith.constant 0 : i32
    return %c0_i32, %arg0 : i32, i32
  }
}

module attributes {stable_mosaic.version = 11 : i64} {
  func.func @kernel(%arg0: i32, %arg1: memref<4x256xf32, #tpu.memory_space<vmem>>, %arg2: memref<32x4xf32, #tpu.memory_space<vmem>>, %arg3: memref<32x1xf32, #tpu.memory_space<vmem>>, %arg4: memref<32x32xf32, #tpu.memory_space<vmem>>, %arg5: memref<32x1xf32, #tpu.memory_space<vmem>>, %arg6: memref<4x32xf32, #tpu.memory_space<vmem>>, %arg7: memref<4x1xf32, #tpu.memory_space<vmem>>, %arg8: memref<4x256xf32, #tpu.memory_space<vmem>>) attributes {dimension_semantics = [#tpu.dimension_semantics<parallel>], iteration_bounds = array<i64: 2>, scalar_prefetch = 0 : i64, scratch_operands = 0 : i64, tpu.core_type = #tpu.core_type<tc>, window_params = [{transform_indices = @transform_0, window_bounds = array<i64: 4, 256>}, {pipeline_mode = #tpu.pipeline_mode<synchronous>, transform_indices = @transform_1, window_bounds = array<i64: 32, 4>}, {pipeline_mode = #tpu.pipeline_mode<synchronous>, transform_indices = @transform_2, window_bounds = array<i64: 32, 1>}, {pipeline_mode = #tpu.pipeline_mode<synchronous>, transform_indices = @transform_3, window_bounds = array<i64: 32, 32>}, {pipeline_mode = #tpu.pipeline_mode<synchronous>, transform_indices = @transform_4, window_bounds = array<i64: 32, 1>}, {pipeline_mode = #tpu.pipeline_mode<synchronous>, transform_indices = @transform_5, window_bounds = array<i64: 4, 32>}, {pipeline_mode = #tpu.pipeline_mode<synchronous>, transform_indices = @transform_6, window_bounds = array<i64: 4, 1>}, {transform_indices = @transform_7, window_bounds = array<i64: 4, 256>}]} {
    %c0 = arith.constant 0 : index
    %c0_0 = arith.constant 0 : index
    %0 = vector.load %arg1[%c0, %c0_0] : memref<4x256xf32, #tpu.memory_space<vmem>>, vector<4x256xf32>
    %c0_1 = arith.constant 0 : index
    %c0_2 = arith.constant 0 : index
    %1 = vector.load %arg2[%c0_1, %c0_2] : memref<32x4xf32, #tpu.memory_space<vmem>>, vector<32x4xf32>
    %cst = arith.constant dense<0.000000e+00> : vector<32x256xf32>
    %2 = tpu.matmul %1, %0, %cst {dimension_numbers = #tpu.dot_dimension_numbers<[1], [0], [0], [1], [0, 0, 1, 1], [], []>} : vector<32x4xf32>, vector<4x256xf32>, vector<32x256xf32> -> vector<32x256xf32>
    %c0_3 = arith.constant 0 : index
    %c0_4 = arith.constant 0 : index
    %3 = vector.load %arg3[%c0_3, %c0_4] : memref<32x1xf32, #tpu.memory_space<vmem>>, vector<32x1xf32>
    %4 = vector.broadcast %3 : vector<32x1xf32> to vector<32x256xf32>
    %5 = arith.addf %2, %4 : vector<32x256xf32>
    %cst_5 = arith.constant 0.000000e+00 : f32
    %6 = vector.broadcast %cst_5 : f32 to vector<32x256xf32>
    %7 = arith.maximumf %5, %6 : vector<32x256xf32>
    %c0_6 = arith.constant 0 : index
    %c0_7 = arith.constant 0 : index
    %8 = vector.load %arg4[%c0_6, %c0_7] : memref<32x32xf32, #tpu.memory_space<vmem>>, vector<32x32xf32>
    %cst_8 = arith.constant dense<0.000000e+00> : vector<32x256xf32>
    %9 = tpu.matmul %8, %7, %cst_8 {dimension_numbers = #tpu.dot_dimension_numbers<[1], [0], [0], [1], [0, 0, 1, 1], [], []>} : vector<32x32xf32>, vector<32x256xf32>, vector<32x256xf32> -> vector<32x256xf32>
    %c0_9 = arith.constant 0 : index
    %c0_10 = arith.constant 0 : index
    %10 = vector.load %arg5[%c0_9, %c0_10] : memref<32x1xf32, #tpu.memory_space<vmem>>, vector<32x1xf32>
    %11 = vector.broadcast %10 : vector<32x1xf32> to vector<32x256xf32>
    %12 = arith.addf %9, %11 : vector<32x256xf32>
    %cst_11 = arith.constant 0.000000e+00 : f32
    %13 = vector.broadcast %cst_11 : f32 to vector<32x256xf32>
    %14 = arith.maximumf %12, %13 : vector<32x256xf32>
    %c0_12 = arith.constant 0 : index
    %c0_13 = arith.constant 0 : index
    %15 = vector.load %arg6[%c0_12, %c0_13] : memref<4x32xf32, #tpu.memory_space<vmem>>, vector<4x32xf32>
    %cst_14 = arith.constant dense<0.000000e+00> : vector<4x256xf32>
    %16 = tpu.matmul %15, %14, %cst_14 {dimension_numbers = #tpu.dot_dimension_numbers<[1], [0], [0], [1], [0, 0, 1, 1], [], []>} : vector<4x32xf32>, vector<32x256xf32>, vector<4x256xf32> -> vector<4x256xf32>
    %c0_15 = arith.constant 0 : index
    %c0_16 = arith.constant 0 : index
    %17 = vector.load %arg7[%c0_15, %c0_16] : memref<4x1xf32, #tpu.memory_space<vmem>>, vector<4x1xf32>
    %18 = vector.broadcast %17 : vector<4x1xf32> to vector<4x256xf32>
    %19 = arith.addf %16, %18 : vector<4x256xf32>
    %c0_17 = arith.constant 0 : index
    %c0_18 = arith.constant 0 : index
    %20 = vector.load %arg8[%c0_17, %c0_18] : memref<4x256xf32, #tpu.memory_space<vmem>>, vector<4x256xf32>
    tpu.vector_store %arg8[%c0_17, %c0_18], %19 {strides = array<i32>} : memref<4x256xf32, #tpu.memory_space<vmem>>, vector<4x256xf32>,
    return
  }
  func.func @transform_0(%arg0: i32) -> (i32, i32) {
    %c0_i32 = arith.constant 0 : i32
    %c0_i32_0 = arith.constant 0 : i32
    return %c0_i32, %arg0 : i32, i32
  }
  func.func @transform_1(%arg0: i32) -> (i32, i32) {
    %c0_i32 = arith.constant 0 : i32
    %c0_i32_0 = arith.constant 0 : i32
    %c0_i32_1 = arith.constant 0 : i32
    return %c0_i32, %c0_i32_0 : i32, i32
  }
  func.func @transform_2(%arg0: i32) -> (i32, i32) {
    %c0_i32 = arith.constant 0 : i32
    %c0_i32_0 = arith.constant 0 : i32
    %c0_i32_1 = arith.constant 0 : i32
    return %c0_i32, %c0_i32_0 : i32, i32
  }
  func.func @transform_3(%arg0: i32) -> (i32, i32) {
    %c0_i32 = arith.constant 0 : i32
    %c0_i32_0 = arith.constant 0 : i32
    %c0_i32_1 = arith.constant 0 : i32
    return %c0_i32, %c0_i32_0 : i32, i32
  }
  func.func @transform_4(%arg0: i32) -> (i32, i32) {
    %c0_i32 = arith.constant 0 : i32
    %c0_i32_0 = arith.constant 0 : i32
    %c0_i32_1 = arith.constant 0 : i32
    return %c0_i32, %c0_i32_0 : i32, i32
  }
  func.func @transform_5(%arg0: i32) -> (i32, i32) {
    %c0_i32 = arith.constant 0 : i32
    %c0_i32_0 = arith.constant 0 : i32
    %c0_i32_1 = arith.constant 0 : i32
    return %c0_i32, %c0_i32_0 : i32, i32
  }
  func.func @transform_6(%arg0: i32) -> (i32, i32) {
    %c0_i32 = arith.constant 0 : i32
    %c0_i32_0 = arith.constant 0 : i32
    %c0_i32_1 = arith.constant 0 : i32
    return %c0_i32, %c0_i32_0 : i32, i32
  }
  func.func @transform_7(%arg0: i32) -> (i32, i32) {
    %c0_i32 = arith.constant 0 : i32
    %c0_i32_0 = arith.constant 0 : i32
    return %c0_i32, %arg0 : i32, i32
  }
}

</mosaic_0001>

<llo_original>
// kernel: tpu_custom_call.1
$region0: #{tpu_custom_call.1}
  #allocation0 [shape = 'u32[]', space=smem, size = 0x4, offset = 0x4, fixed_abs, tag = 'smem constant byte address 0x4 - core index']
  #allocation1 [shape = 'u32[144,128]{1,0:T(1,128)}', space=vmem, size = 0x12000, scoped, tag = 'internal scratch']
  %s0 = inlined_call_operand.vmem [shape: f32[4,512], index: 0, kind: input, shape index: {}]
  %s1 = inlined_call_operand.vmem [shape: f32[32,4], index: 1, kind: input, shape index: {}]
  %s2 = inlined_call_operand.vmem [shape: f32[32,1], index: 2, kind: input, shape index: {}]
  %s3 = inlined_call_operand.vmem [shape: f32[32,32], index: 3, kind: input, shape index: {}]
  %s4 = inlined_call_operand.vmem [shape: f32[32,1], index: 4, kind: input, shape index: {}]
  %s5 = inlined_call_operand.vmem [shape: f32[4,32], index: 5, kind: input, shape index: {}]
  %s6 = inlined_call_operand.vmem [shape: f32[4,1], index: 6, kind: input, shape index: {}]
  %s7 = inlined_call_operand.hbm [shape: f32[4,512], index: 7, kind: output, shape index: {}]
  %s8 = sld [smem:[#allocation0]]
  $region61: #{tpu_custom_call.1} parent=0
    _
  %s10 = ssub.s32 1, %s8
  %s11 = scalar_select 0, %s10, %s8
  $region1: #{tpu_custom_call.1} parent=0
    #allocation2 [shape = 'u8[8192]{0}', space=vmem, size = 0x2000, scoped, tag = 'output window, operand 0']
    #allocation3 [shape = 's32[2]{0}', space=sflag, size = 0x8, scoped, tag = 'scoped memory for tpu_custom_call.1']
    %12 = vsyncpa [#allocation3], 0
    %s13 = scalar_lea.sflag [#allocation3], 1
    %14 = vsyncpa %s13, 0
    loop: start=0, step=1, limit=4
    $region2: #{tpu_custom_call.1} parent=1 // loop_pre_header
      _
    $region3: #{tpu_custom_call.1} parent=1 // loop_header
      %s16 = sphi 0, %s20
      %p17 = scmp.ge.s32.totalorder %s16, 4
      %s26 = sphi 0, %s28
      %s29 = sphi 0, %s26
      %s30 = sphi 0, %s29
      %s46 = sphi 0, %s30
      %s50 = sphi 0, %s50
      %s52 = sphi 0, %s50
      %s53 = sphi 0, %s52
      %s67 = sphi 0, %s53
      %s71 = sphi 0, %s71
      %s73 = sphi 0, %s71
      %s74 = sphi 0, %s73
      %s88 = sphi 0, %s74
      %s92 = sphi 0, %s92
      %s94 = sphi 0, %s92
      %s95 = sphi 0, %s94
      %s109 = sphi 0, %s95
      %s113 = sphi 0, %s113
      %s115 = sphi 0, %s113
      %s116 = sphi 0, %s115
      %s130 = sphi 0, %s116
      %s134 = sphi 0, %s134
      %s136 = sphi 0, %s134
      %s137 = sphi 0, %s136
      %s151 = sphi 0, %s137
      %s155 = sphi 0, %s155
      %s157 = sphi 0, %s155
      %s158 = sphi 0, %s157
      %s172 = sphi 0, %s158
      %s178 = sphi 0, %s180
      %s181 = sphi 0, %s178
      %s182 = sphi 0, %s181
      %s198 = sphi 0, %s182
    $region4: #{tpu_custom_call.1} parent=1 // loop_header_branch
      %19 = sbr.rel (%p17) target = $region8
    $region5: #{tpu_custom_call.1} parent=1 // loop_body
      %s21 = ssub.s32 %s16, 1
      %s22 = ssub.s32 %s16, 2
      %s23 = sadd.s32 %s16, 1
      %s24 = ssub.s32 %s16, %s23
      %p25 = scmp.eq.s32.totalorder %s24, 0
      %s27 = sadd.s32 %s26, 1
      %s28 = scalar_select %p25, %s26, %s27
      %p31 = pneg %p25
      %p32 = scmp.eq.s32.totalorder %s16, 1
      %p33 = por %p31, %p32
      %p34 = scmp.ne.s32.totalorder %s26, %s29
      %p35 = scmp.eq.s32.totalorder %s16, 0
      %p36 = por %p34, %p35
      %p37 = scmp.ne.s32.totalorder %s26, %s29
      %p38 = scmp.eq.s32.totalorder %s21, 1
      %p39 = por %p37, %p38
      %p40 = scmp.ne.s32.totalorder %s29, %s30
      %p41 = scmp.eq.s32.totalorder %s21, 0
      %p42 = por %p40, %p41
      %p43 = scmp.ne.s32.totalorder %s29, %s30
      %p44 = scmp.eq.s32.totalorder %s22, 1
      %p45 = por %p43, %p44
      %p47 = scmp.ne.s32.totalorder %s30, %s46
      %p48 = scmp.eq.s32.totalorder %s22, 0
      %p49 = por %p47, %p48
      %s51 = sadd.s32 %s50, 1
      %p54 = scmp.eq.s32.totalorder %s16, 1
      %p55 = scmp.ne.s32.totalorder %s50, %s52
      %p56 = scmp.eq.s32.totalorder %s16, 0
      %p57 = por %p55, %p56
      %p58 = scmp.ne.s32.totalorder %s50, %s52
      %p59 = scmp.eq.s32.totalorder %s21, 1
      %p60 = por %p58, %p59
      %p61 = scmp.ne.s32.totalorder %s52, %s53
      %p62 = scmp.eq.s32.totalorder %s21, 0
      %p63 = por %p61, %p62
      %p64 = scmp.ne.s32.totalorder %s52, %s53
      %p65 = scmp.eq.s32.totalorder %s22, 1
      %p66 = por %p64, %p65
      %p68 = scmp.ne.s32.totalorder %s53, %s67
      %p69 = scmp.eq.s32.totalorder %s22, 0
      %p70 = por %p68, %p69
      %s72 = sadd.s32 %s71, 1
      %p75 = scmp.eq.s32.totalorder %s16, 1
      %p76 = scmp.ne.s32.totalorder %s71, %s73
      %p77 = scmp.eq.s32.totalorder %s16, 0
      %p78 = por %p76, %p77
      %p79 = scmp.ne.s32.totalorder %s71, %s73
      %p80 = scmp.eq.s32.totalorder %s21, 1
      %p81 = por %p79, %p80
      %p82 = scmp.ne.s32.totalorder %s73, %s74
      %p83 = scmp.eq.s32.totalorder %s21, 0
      %p84 = por %p82, %p83
      %p85 = scmp.ne.s32.totalorder %s73, %s74
      %p86 = scmp.eq.s32.totalorder %s22, 1
      %p87 = por %p85, %p86
      %p89 = scmp.ne.s32.totalorder %s74, %s88
      %p90 = scmp.eq.s32.totalorder %s22, 0
      %p91 = por %p89, %p90
      %s93 = sadd.s32 %s92, 1
      %p96 = scmp.eq.s32.totalorder %s16, 1
      %p97 = scmp.ne.s32.totalorder %s92, %s94
      %p98 = scmp.eq.s32.totalorder %s16, 0
      %p99 = por %p97, %p98
      %p100 = scmp.ne.s32.totalorder %s92, %s94
      %p101 = scmp.eq.s32.totalorder %s21, 1
      %p102 = por %p100, %p101
      %p103 = scmp.ne.s32.totalorder %s94, %s95
      %p104 = scmp.eq.s32.totalorder %s21, 0
      %p105 = por %p103, %p104
      %p106 = scmp.ne.s32.totalorder %s94, %s95
      %p107 = scmp.eq.s32.totalorder %s22, 1
      %p108 = por %p106, %p107
      %p110 = scmp.ne.s32.totalorder %s95, %s109
      %p111 = scmp.eq.s32.totalorder %s22, 0
      %p112 = por %p110, %p111
      %s114 = sadd.s32 %s113, 1
      %p117 = scmp.eq.s32.totalorder %s16, 1
      %p118 = scmp.ne.s32.totalorder %s113, %s115
      %p119 = scmp.eq.s32.totalorder %s16, 0
      %p120 = por %p118, %p119
      %p121 = scmp.ne.s32.totalorder %s113, %s115
      %p122 = scmp.eq.s32.totalorder %s21, 1
      %p123 = por %p121, %p122
      %p124 = scmp.ne.s32.totalorder %s115, %s116
      %p125 = scmp.eq.s32.totalorder %s21, 0
      %p126 = por %p124, %p125
      %p127 = scmp.ne.s32.totalorder %s115, %s116
      %p128 = scmp.eq.s32.totalorder %s22, 1
      %p129 = por %p127, %p128
      %p131 = scmp.ne.s32.totalorder %s116, %s130
      %p132 = scmp.eq.s32.totalorder %s22, 0
      %p133 = por %p131, %p132
      %s135 = sadd.s32 %s134, 1
      %p138 = scmp.eq.s32.totalorder %s16, 1
      %p139 = scmp.ne.s32.totalorder %s134, %s136
      %p140 = scmp.eq.s32.totalorder %s16, 0
      %p141 = por %p139, %p140
      %p142 = scmp.ne.s32.totalorder %s134, %s136
      %p143 = scmp.eq.s32.totalorder %s21, 1
      %p144 = por %p142, %p143
      %p145 = scmp.ne.s32.totalorder %s136, %s137
      %p146 = scmp.eq.s32.totalorder %s21, 0
      %p147 = por %p145, %p146
      %p148 = scmp.ne.s32.totalorder %s136, %s137
      %p149 = scmp.eq.s32.totalorder %s22, 1
      %p150 = por %p148, %p149
      %p152 = scmp.ne.s32.totalorder %s137, %s151
      %p153 = scmp.eq.s32.totalorder %s22, 0
      %p154 = por %p152, %p153
      %s156 = sadd.s32 %s155, 1
      %p159 = scmp.eq.s32.totalorder %s16, 1
      %p160 = scmp.ne.s32.totalorder %s155, %s157
      %p161 = scmp.eq.s32.totalorder %s16, 0
      %p162 = por %p160, %p161
      %p163 = scmp.ne.s32.totalorder %s155, %s157
      %p164 = scmp.eq.s32.totalorder %s21, 1
      %p165 = por %p163, %p164
      %p166 = scmp.ne.s32.totalorder %s157, %s158
      %p167 = scmp.eq.s32.totalorder %s21, 0
      %p168 = por %p166, %p167
      %p169 = scmp.ne.s32.totalorder %s157, %s158
      %p170 = scmp.eq.s32.totalorder %s22, 1
      %p171 = por %p169, %p170
      %p173 = scmp.ne.s32.totalorder %s158, %s172
      %p174 = scmp.eq.s32.totalorder %s22, 0
      %p175 = por %p173, %p174
      %s176 = ssub.s32 %s16, %s23
      %p177 = scmp.eq.s32.totalorder %s176, 0
      %s179 = sadd.s32 %s178, 1
      %s180 = scalar_select %p177, %s178, %s179
      %p183 = pneg %p177
      %p184 = scmp.eq.s32.totalorder %s16, 1
      %p185 = por %p183, %p184
      %p186 = scmp.ne.s32.totalorder %s178, %s181
      %p187 = scmp.eq.s32.totalorder %s16, 0
      %p188 = por %p186, %p187
      %p189 = scmp.ne.s32.totalorder %s178, %s181
      %p190 = scmp.eq.s32.totalorder %s21, 1
      %p191 = por %p189, %p190
      %p192 = scmp.ne.s32.totalorder %s181, %s182
      %p193 = scmp.eq.s32.totalorder %s21, 0
      %p194 = por %p192, %p193
      %p195 = scmp.ne.s32.totalorder %s181, %s182
      %p196 = scmp.eq.s32.totalorder %s22, 1
      %p197 = por %p195, %p196
      %p199 = scmp.ne.s32.totalorder %s182, %s198
      %p200 = scmp.eq.s32.totalorder %s22, 0
      %p201 = por %p199, %p200
      %p202 = scmp.le.s32.totalorder 1, %s16
      %p203 = scmp.lt.s32.totalorder %s16, 3
      %p204 = pnand %p202, %p203
      %p205 = pneg %p204
      // Predicated region
      $region9: #{tpu_custom_call.1} parent=5 // pred_check
        _
      $region10: #{tpu_custom_call.1} parent=5 // pred_check_branch
        %207 = sbr.rel (%p204) target = $region12
      $region11: #{tpu_custom_call.1} parent=5 // pred_region
        %s208 = ssub.s32 %s16, 1
        // Predicated region
        $region13: #{tpu_custom_call.1} parent=11 // pred_check
          %p209 = pneg %p63
        $region14: #{tpu_custom_call.1} parent=11 // pred_check_branch
          %211 = sbr.rel (%p209) target = $region16
        $region15: #{tpu_custom_call.1} parent=11 // pred_region
          _
        $region16: #{tpu_custom_call.1} parent=11 // pred_fallthru
          _
        // Predicated region
        $region17: #{tpu_custom_call.1} parent=11 // pred_check
          %p212 = pneg %p84
        $region18: #{tpu_custom_call.1} parent=11 // pred_check_branch
          %214 = sbr.rel (%p212) target = $region20
        $region19: #{tpu_custom_call.1} parent=11 // pred_region
          _
        $region20: #{tpu_custom_call.1} parent=11 // pred_fallthru
          _
        // Predicated region
        $region21: #{tpu_custom_call.1} parent=11 // pred_check
          %p215 = pneg %p105
        $region22: #{tpu_custom_call.1} parent=11 // pred_check_branch
          %217 = sbr.rel (%p215) target = $region24
        $region23: #{tpu_custom_call.1} parent=11 // pred_region
          _
        $region24: #{tpu_custom_call.1} parent=11 // pred_fallthru
          _
        // Predicated region
        $region25: #{tpu_custom_call.1} parent=11 // pred_check
          %p218 = pneg %p126
        $region26: #{tpu_custom_call.1} parent=11 // pred_check_branch
          %220 = sbr.rel (%p218) target = $region28
        $region27: #{tpu_custom_call.1} parent=11 // pred_region
          _
        $region28: #{tpu_custom_call.1} parent=11 // pred_fallthru
          _
        // Predicated region
        $region29: #{tpu_custom_call.1} parent=11 // pred_check
          %p221 = pneg %p147
        $region30: #{tpu_custom_call.1} parent=11 // pred_check_branch
          %223 = sbr.rel (%p221) target = $region32
        $region31: #{tpu_custom_call.1} parent=11 // pred_region
          _
        $region32: #{tpu_custom_call.1} parent=11 // pred_fallthru
          _
        // Predicated region
        $region33: #{tpu_custom_call.1} parent=11 // pred_check
          %p224 = pneg %p168
        $region34: #{tpu_custom_call.1} parent=11 // pred_check_branch
          %226 = sbr.rel (%p224) target = $region36
        $region35: #{tpu_custom_call.1} parent=11 // pred_region
          _
        $region36: #{tpu_custom_call.1} parent=11 // pred_fallthru
          _
      $region12: #{tpu_custom_call.1} parent=5 // pred_fallthru
        _
      %p227 = scmp.lt.s32.totalorder %s16, 2
      // Predicated region
      $region37: #{tpu_custom_call.1} parent=5 // pred_check
        %p228 = pneg %p227
      $region38: #{tpu_custom_call.1} parent=5 // pred_check_branch
        %230 = sbr.rel (%p228) target = $region40
      $region39: #{tpu_custom_call.1} parent=5 // pred_region
        // Predicated region
        $region41: #{tpu_custom_call.1} parent=39 // pred_check
          %p231 = pneg %p36
        $region42: #{tpu_custom_call.1} parent=39 // pred_check_branch
          %233 = sbr.rel (%p231) target = $region44
        $region43: #{tpu_custom_call.1} parent=39 // pred_region
          %s234 = smul.u32 2, %s16
          %p235 = scmp.lt.s32.totalorder %s234, 3
          %s236 = scalar_select %p235, %s234, 3
          %s237 = smul.addr %s236, 4
          %s238 = scalar_lea.vmem %s0, %s237
          %s239 = smul.u32 2, %s16
        $region44: #{tpu_custom_call.1} parent=39 // pred_fallthru
          _
      $region40: #{tpu_custom_call.1} parent=5 // pred_fallthru
        _
      %p240 = scmp.le.s32.totalorder 1, %s16
      %p241 = scmp.lt.s32.totalorder %s16, 3
      %p242 = pnand %p240, %p241
      %p243 = pneg %p242
      // Predicated region
      $region45: #{tpu_custom_call.1} parent=5 // pred_check
        _
      $region46: #{tpu_custom_call.1} parent=5 // pred_check_branch
        %245 = sbr.rel (%p242) target = $region48
      $region47: #{tpu_custom_call.1} parent=5 // pred_region
        %s246 = ssub.s32 %s16, 1
        %s247 = smul.u32 2, %s21
        %p248 = scmp.lt.s32.totalorder %s247, 3
        %s249 = scalar_select %p248, %s247, 3
        %s250 = smul.addr %s249, 4
        %s251 = scalar_lea.vmem %s0, %s250
        %p252 = pneg %p42
        %p253 = pneg %p39
        %p254 = pneg %p63
        %p255 = pneg %p60
        %p256 = pneg %p84
        %p257 = pneg %p81
        %p258 = pneg %p105
        %p259 = pneg %p102
        %p260 = pneg %p126
        %p261 = pneg %p123
        %p262 = pneg %p147
        %p263 = pneg %p144
        %p264 = pneg %p168
        %p265 = pneg %p165
        %p266 = pneg %p194
        %p267 = pneg %p191
        %s268 = sand.u32 %s181, 1
        %s269 = scalar_lea.sflag [#allocation3], %s268
        %s270 = sand.u32 %s181, 1
        %s271 = smul.addr %s270, 8
        %s272 = scalar_lea.vmem [#allocation2], %s271
        %s273 = smul.u32 2, %s21
        %p274 = scmp.lt.s32.totalorder %s273, 3
        %s275 = scalar_select %p274, %s273, 3
        %s276 = smul.addr %s275, 4
        %s277 = scalar_lea.vmem %s0, %s276
        %s278 = smul.u32 2, %s21
        %s279 = smul.u32 2, %s21
        %v280 = vld [vmem:[%s277] sm:$0xff]
        %v281 = vld [vmem:[%s1] sm:$0xff]
        %v282 = vld [vmem:[%s1 + $0x8] sm:$0xff]
        %v283 = vld [vmem:[%s1 + $0x10] sm:$0xff]
        %v284 = vld [vmem:[%s1 + $0x18] sm:$0xff]
        %v285 = vld [vmem:[%s2] sm:$0xff]
        %v286 = vld [vmem:[%s2 + $0x8] sm:$0xff]
        %v287 = vld [vmem:[%s2 + $0x10] sm:$0xff]
        %v288 = vld [vmem:[%s2 + $0x18] sm:$0xff]
        %290 = vset.pattern.permute.xlu0 0
        %291 = vperm.xlu0 %290, %v285
        %v292 = vpop.permute.xlu0 %291
        %295 = vset.pattern.permute.xlu0 0
        %296 = vperm.xlu0 %295, %v286
        %v297 = vpop.permute.xlu0 %296
        %300 = vset.pattern.permute.xlu0 0
        %301 = vperm.xlu0 %300, %v287
        %v302 = vpop.permute.xlu0 %301
        %305 = vset.pattern.permute.xlu0 0
        %306 = vperm.xlu0 %305, %v288
        %v307 = vpop.permute.xlu0 %306
        %v310 = vcombine.high %v280, %v280
        %vm311 = vcmask 31744
        %v313 = vsel %vm311, %v281, 0
        %v316 = vsel %vm311, %v282, 0
        %v319 = vsel %vm311, %v283, 0
        %v322 = vsel %vm311, %v284, 0
        %vm324 = vcmask 1043456
        %v325 = vsel %vm324, %v280, 0
        %v327 = vsel %vm324, %v310, 0
        %329 = vmatprep.subr.mxu0 %v327
        %330 = vmatpush1.msra.mxu0 %v325
        %331 = vmatprep.subr.mxu0 0.0
        %332 = vmatpush1.msra.mxu0 0.0
        %333 = vmatprep.subr.mxu0 0.0
        %334 = vmatpush1.msra.mxu0 0.0
        %335 = vmatprep.subr.mxu0 0.0
        %336 = vmatpush1.msra.mxu0 0.0
        %337 = vmatprep.subr.mxu0 0.0
        %338 = vmatpush1.msra.mxu0 0.0
        %339 = vmatprep.subr.mxu0 0.0
        %340 = vmatpush1.msra.mxu0 0.0
        %341 = vmatprep.subr.mxu0 0.0
        %342 = vmatpush1.msra.mxu0 0.0
        %343 = vmatprep.subr.mxu0 0.0
        %344 = vmatpush1.msra.mxu0 0.0
        %345 = vmatprep.subr.mxu0 0.0
        %346 = vmatpush1.msra.mxu0 0.0
        %347 = vmatprep.subr.mxu0 0.0
        %348 = vmatpush1.msra.mxu0 0.0
        %349 = vmatprep.subr.mxu0 0.0
        %350 = vmatpush1.msra.mxu0 0.0
        %351 = vmatprep.subr.mxu0 0.0
        %352 = vmatpush1.msra.mxu0 0.0
        %353 = vmatprep.subr.mxu0 0.0
        %354 = vmatpush1.msra.mxu0 0.0
        %355 = vmatprep.subr.mxu0 0.0
        %356 = vmatpush1.msra.mxu0 0.0
        %357 = vmatprep.subr.mxu0 0.0
        %358 = vmatpush1.msra.mxu0 0.0
        %359 = vmatprep.subr.mxu0 0.0
        %360 = vmatpush1.msra.mxu0 0.0
        %361 = vmatprep.subr.mxu0 0.0
        %362 = vmatpush1.msra.mxu0 0.0
        %363 = vmatprep.subr.mxu0 0.0
        %364 = vmatpush1.msra.mxu0 0.0
        %365 = vmatprep.subr.mxu0 0.0
        %366 = vmatpush1.msra.mxu0 0.0
        %367 = vmatprep.subr.mxu0 0.0
        %368 = vmatpush1.msra.mxu0 0.0
        %369 = vmatprep.subr.mxu0 0.0
        %370 = vmatpush1.msra.mxu0 0.0
        %371 = vmatprep.subr.mxu0 0.0
        %372 = vmatpush1.msra.mxu0 0.0
        %373 = vmatprep.subr.mxu0 0.0
        %374 = vmatpush1.msra.mxu0 0.0
        %375 = vmatprep.subr.mxu0 0.0
        %376 = vmatpush1.msra.mxu0 0.0
        %377 = vmatprep.subr.mxu0 0.0
        %378 = vmatpush1.msra.mxu0 0.0
        %379 = vmatprep.subr.mxu0 0.0
        %380 = vmatpush1.msra.mxu0 0.0
        %381 = vmatprep.subr.mxu0 0.0
        %382 = vmatpush1.msra.mxu0 0.0
        %383 = vmatprep.subr.mxu0 0.0
        %384 = vmatpush1.msra.mxu0 0.0
        %385 = vmatprep.subr.mxu0 0.0
        %386 = vmatpush1.msra.mxu0 0.0
        %387 = vmatprep.subr.mxu0 0.0
        %388 = vmatpush1.msra.mxu0 0.0
        %389 = vmatprep.subr.mxu0 0.0
        %390 = vmatpush1.msra.mxu0 0.0
        %391 = vmatprep.subr.mxu0 0.0
        %392 = vmatpush1.msra.mxu0 0.0
        %393 = vmatprep.mubr.f32.mxu0 0.0
        %394 = vmatmul.mubr.f32.gmra.mrb[0].mxu0 %v313
        %v395 = vpop.f32.mrb[0].mxu0
        %v396 = vadd.f32 %v292, %v395
        %v397 = vpop.f32.mrb[0].mxu0
        %v398 = vadd.f32 %v292, %v397
        %399 = vmatprep.mubr.f32.mxu0 0.0
        %400 = vmatmul.mubr.f32.gmra.mrb[0].mxu0 %v316
        %v401 = vpop.f32.mrb[0].mxu0
        %v402 = vadd.f32 %v297, %v401
        %v403 = vpop.f32.mrb[0].mxu0
        %v404 = vadd.f32 %v297, %v403
        %405 = vmatprep.mubr.f32.mxu0 0.0
        %406 = vmatmul.mubr.f32.gmra.mrb[0].mxu0 %v319
        %v407 = vpop.f32.mrb[0].mxu0
        %v408 = vadd.f32 %v302, %v407
        %v409 = vpop.f32.mrb[0].mxu0
        %v410 = vadd.f32 %v302, %v409
        %411 = vmatprep.mubr.f32.mxu0 0.0
        %412 = vmatmul.mubr.f32.gmra.mrb[0].mxu0 %v322
        %v413 = vpop.f32.mrb[0].mxu0
        %v414 = vadd.f32 %v307, %v413
        %v415 = vpop.f32.mrb[0].mxu0
        %v416 = vadd.f32 %v307, %v415
        %417 = vdwg.mxu0
        %v418 = vmax.f32 %v396, 0.0
        %v419 = vmax.f32 %v398, 0.0
        %v420 = vmax.f32 %v402, 0.0
        %v421 = vmax.f32 %v404, 0.0
        %v422 = vmax.f32 %v408, 0.0
        %v423 = vmax.f32 %v410, 0.0
        %v424 = vmax.f32 %v414, 0.0
        %v425 = vmax.f32 %v416, 0.0
        %v426 = vld [vmem:[%s3] sm:$0xff]
        %v427 = vld [vmem:[%s3 + $0x8] sm:$0xff]
        %v428 = vld [vmem:[%s3 + $0x10] sm:$0xff]
        %v429 = vld [vmem:[%s3 + $0x18] sm:$0xff]
        %v430 = vld [vmem:[%s4] sm:$0xff]
        %v431 = vld [vmem:[%s4 + $0x8] sm:$0xff]
        %v432 = vld [vmem:[%s4 + $0x10] sm:$0xff]
        %v433 = vld [vmem:[%s4 + $0x18] sm:$0xff]
        %435 = vset.pattern.permute.xlu0 0
        %436 = vperm.xlu0 %435, %v430
        %v437 = vpop.permute.xlu0 %436
        %440 = vset.pattern.permute.xlu0 0
        %441 = vperm.xlu0 %440, %v431
        %v442 = vpop.permute.xlu0 %441
        %445 = vset.pattern.permute.xlu0 0
        %446 = vperm.xlu0 %445, %v432
        %v447 = vpop.permute.xlu0 %446
        %450 = vset.pattern.permute.xlu0 0
        %451 = vperm.xlu0 %450, %v433
        %v452 = vpop.permute.xlu0 %451
        %vm454 = vcmask 261120
        %v456 = vsel %vm454, %v426, 0
        %v459 = vsel %vm454, %v427, 0
        %v462 = vsel %vm454, %v428, 0
        %v465 = vsel %vm454, %v429, 0
        %467 = vmatprep.subr.mxu0 %v419
        %468 = vmatpush1.msra.mxu0 %v418
        %469 = vmatprep.subr.mxu0 %v421
        %470 = vmatpush1.msra.mxu0 %v420
        %471 = vmatprep.subr.mxu0 %v423
        %472 = vmatpush1.msra.mxu0 %v422
        %473 = vmatprep.subr.mxu0 %v425
        %474 = vmatpush1.msra.mxu0 %v424
        %475 = vmatprep.subr.mxu0 0.0
        %476 = vmatpush1.msra.mxu0 0.0
        %477 = vmatprep.subr.mxu0 0.0
        %478 = vmatpush1.msra.mxu0 0.0
        %479 = vmatprep.subr.mxu0 0.0
        %480 = vmatpush1.msra.mxu0 0.0
        %481 = vmatprep.subr.mxu0 0.0
        %482 = vmatpush1.msra.mxu0 0.0
        %483 = vmatprep.subr.mxu0 0.0
        %484 = vmatpush1.msra.mxu0 0.0
        %485 = vmatprep.subr.mxu0 0.0
        %486 = vmatpush1.msra.mxu0 0.0
        %487 = vmatprep.subr.mxu0 0.0
        %488 = vmatpush1.msra.mxu0 0.0
        %489 = vmatprep.subr.mxu0 0.0
        %490 = vmatpush1.msra.mxu0 0.0
        %491 = vmatprep.subr.mxu0 0.0
        %492 = vmatpush1.msra.mxu0 0.0
        %493 = vmatprep.subr.mxu0 0.0
        %494 = vmatpush1.msra.mxu0 0.0
        %495 = vmatprep.subr.mxu0 0.0
        %496 = vmatpush1.msra.mxu0 0.0
        %497 = vmatprep.subr.mxu0 0.0
        %498 = vmatpush1.msra.mxu0 0.0
        %499 = vmatprep.subr.mxu0 0.0
        %500 = vmatpush1.msra.mxu0 0.0
        %501 = vmatprep.subr.mxu0 0.0
        %502 = vmatpush1.msra.mxu0 0.0
        %503 = vmatprep.subr.mxu0 0.0
        %504 = vmatpush1.msra.mxu0 0.0
        %505 = vmatprep.subr.mxu0 0.0
        %506 = vmatpush1.msra.mxu0 0.0
        %507 = vmatprep.subr.mxu0 0.0
        %508 = vmatpush1.msra.mxu0 0.0
        %509 = vmatprep.subr.mxu0 0.0
        %510 = vmatpush1.msra.mxu0 0.0
        %511 = vmatprep.subr.mxu0 0.0
        %512 = vmatpush1.msra.mxu0 0.0
        %513 = vmatprep.subr.mxu0 0.0
        %514 = vmatpush1.msra.mxu0 0.0
        %515 = vmatprep.subr.mxu0 0.0
        %516 = vmatpush1.msra.mxu0 0.0
        %517 = vmatprep.subr.mxu0 0.0
        %518 = vmatpush1.msra.mxu0 0.0
        %519 = vmatprep.subr.mxu0 0.0
        %520 = vmatpush1.msra.mxu0 0.0
        %521 = vmatprep.subr.mxu0 0.0
        %522 = vmatpush1.msra.mxu0 0.0
        %523 = vmatprep.subr.mxu0 0.0
        %524 = vmatpush1.msra.mxu0 0.0
        %525 = vmatprep.subr.mxu0 0.0
        %526 = vmatpush1.msra.mxu0 0.0
        %527 = vmatprep.subr.mxu0 0.0
        %528 = vmatpush1.msra.mxu0 0.0
        %529 = vmatprep.subr.mxu0 0.0
        %530 = vmatpush1.msra.mxu0 0.0
        %531 = vmatprep.mubr.f32.mxu0 0.0
        %532 = vmatmul.mubr.f32.gmra.mrb[0].mxu0 %v456
        %v533 = vpop.f32.mrb[0].mxu0
        %v534 = vadd.f32 %v437, %v533
        %v535 = vpop.f32.mrb[0].mxu0
        %v536 = vadd.f32 %v437, %v535
        %537 = vmatprep.mubr.f32.mxu0 0.0
        %538 = vmatmul.mubr.f32.gmra.mrb[0].mxu0 %v459
        %v539 = vpop.f32.mrb[0].mxu0
        %v540 = vadd.f32 %v442, %v539
        %v541 = vpop.f32.mrb[0].mxu0
        %v542 = vadd.f32 %v442, %v541
        %543 = vmatprep.mubr.f32.mxu0 0.0
        %544 = vmatmul.mubr.f32.gmra.mrb[0].mxu0 %v462
        %v545 = vpop.f32.mrb[0].mxu0
        %v546 = vadd.f32 %v447, %v545
        %v547 = vpop.f32.mrb[0].mxu0
        %v548 = vadd.f32 %v447, %v547
        %549 = vmatprep.mubr.f32.mxu0 0.0
        %550 = vmatmul.mubr.f32.gmra.mrb[0].mxu0 %v465
        %v551 = vpop.f32.mrb[0].mxu0
        %v552 = vadd.f32 %v452, %v551
        %v553 = vpop.f32.mrb[0].mxu0
        %v554 = vadd.f32 %v452, %v553
        %555 = vdwg.mxu0
        %v556 = vmax.f32 %v534, 0.0
        %v557 = vmax.f32 %v536, 0.0
        %v558 = vmax.f32 %v540, 0.0
        %v559 = vmax.f32 %v542, 0.0
        %v560 = vmax.f32 %v546, 0.0
        %v561 = vmax.f32 %v548, 0.0
        %v562 = vmax.f32 %v552, 0.0
        %v563 = vmax.f32 %v554, 0.0
        %v564 = vld [vmem:[%s5] sm:$0xf]
        %v565 = vld [vmem:[%s6] sm:$0xf]
        %567 = vset.pattern.permute.xlu0 0
        %568 = vperm.xlu0 %567, %v565
        %v569 = vpop.permute.xlu0 %568
        %v572 = vsel %vm454, %v564, 0
        %574 = vmatprep.subr.mxu0 %v557
        %575 = vmatpush1.msra.mxu0 %v556
        %576 = vmatprep.subr.mxu0 %v559
        %577 = vmatpush1.msra.mxu0 %v558
        %578 = vmatprep.subr.mxu0 %v561
        %579 = vmatpush1.msra.mxu0 %v560
        %580 = vmatprep.subr.mxu0 %v563
        %581 = vmatpush1.msra.mxu0 %v562
        %582 = vmatprep.subr.mxu0 0.0
        %583 = vmatpush1.msra.mxu0 0.0
        %584 = vmatprep.subr.mxu0 0.0
        %585 = vmatpush1.msra.mxu0 0.0
        %586 = vmatprep.subr.mxu0 0.0
        %587 = vmatpush1.msra.mxu0 0.0
        %588 = vmatprep.subr.mxu0 0.0
        %589 = vmatpush1.msra.mxu0 0.0
        %590 = vmatprep.subr.mxu0 0.0
        %591 = vmatpush1.msra.mxu0 0.0
        %592 = vmatprep.subr.mxu0 0.0
        %593 = vmatpush1.msra.mxu0 0.0
        %594 = vmatprep.subr.mxu0 0.0
        %595 = vmatpush1.msra.mxu0 0.0
        %596 = vmatprep.subr.mxu0 0.0
        %597 = vmatpush1.msra.mxu0 0.0
        %598 = vmatprep.subr.mxu0 0.0
        %599 = vmatpush1.msra.mxu0 0.0
        %600 = vmatprep.subr.mxu0 0.0
        %601 = vmatpush1.msra.mxu0 0.0
        %602 = vmatprep.subr.mxu0 0.0
        %603 = vmatpush1.msra.mxu0 0.0
        %604 = vmatprep.subr.mxu0 0.0
        %605 = vmatpush1.msra.mxu0 0.0
        %606 = vmatprep.subr.mxu0 0.0
        %607 = vmatpush1.msra.mxu0 0.0
        %608 = vmatprep.subr.mxu0 0.0
        %609 = vmatpush1.msra.mxu0 0.0
        %610 = vmatprep.subr.mxu0 0.0
        %611 = vmatpush1.msra.mxu0 0.0
        %612 = vmatprep.subr.mxu0 0.0
        %613 = vmatpush1.msra.mxu0 0.0
        %614 = vmatprep.subr.mxu0 0.0
        %615 = vmatpush1.msra.mxu0 0.0
        %616 = vmatprep.subr.mxu0 0.0
        %617 = vmatpush1.msra.mxu0 0.0
        %618 = vmatprep.subr.mxu0 0.0
        %619 = vmatpush1.msra.mxu0 0.0
        %620 = vmatprep.subr.mxu0 0.0
        %621 = vmatpush1.msra.mxu0 0.0
        %622 = vmatprep.subr.mxu0 0.0
        %623 = vmatpush1.msra.mxu0 0.0
        %624 = vmatprep.subr.mxu0 0.0
        %625 = vmatpush1.msra.mxu0 0.0
        %626 = vmatprep.subr.mxu0 0.0
        %627 = vmatpush1.msra.mxu0 0.0
        %628 = vmatprep.subr.mxu0 0.0
        %629 = vmatpush1.msra.mxu0 0.0
        %630 = vmatprep.subr.mxu0 0.0
        %631 = vmatpush1.msra.mxu0 0.0
        %632 = vmatprep.subr.mxu0 0.0
        %633 = vmatpush1.msra.mxu0 0.0
        %634 = vmatprep.subr.mxu0 0.0
        %635 = vmatpush1.msra.mxu0 0.0
        %636 = vmatprep.subr.mxu0 0.0
        %637 = vmatpush1.msra.mxu0 0.0
        %638 = vmatprep.mubr.f32.mxu0 0.0
        %639 = vmatmul.mubr.f32.gmra.mrb[0].mxu0 %v572
        %v640 = vpop.f32.mrb[0].mxu0
        %v641 = vadd.f32 %v569, %v640
        %v642 = vpop.f32.mrb[0].mxu0
        %v643 = vadd.f32 %v569, %v642
        %644 = vdwg.mxu0
        %v647 = vcombine.low %v641, %v643
        %649 = vst [vmem:[%s272] sm:$0xff] %v647
        %s650 = sand.u32 %s181, 1
        %s651 = scalar_lea.sflag [#allocation3], %s650
        %s652 = sand.u32 %s181, 1
        %s653 = smul.addr %s652, 8
        %s654 = scalar_lea.vmem [#allocation2], %s653
        // Predicated region
        $region49: #{tpu_custom_call.1} parent=47 // pred_check
          %p655 = pneg %p191
        $region50: #{tpu_custom_call.1} parent=47 // pred_check_branch
          %657 = sbr.rel (%p655) target = $region52
        $region51: #{tpu_custom_call.1} parent=47 // pred_region
          %s658 = smul.u32 2, %s21
          %s660 = ssub.s32 128, 128
          %661 = vsyncadd %s651, %s660
          %s662 = smul.addr %s658, 64
          %s663 = scalar_lea.hbm %s7, %s662
          %s665 = sshll.u32 %s654, 4
          %s666 = int_to_ptr.vmem [resolvable:$true] %s665
          %668 = dma.vmem_to_hbm [thread:$0]  %s666, 128, %s663, %s651
        $region52: #{tpu_custom_call.1} parent=47 // pred_fallthru
          _
      $region48: #{tpu_custom_call.1} parent=5 // pred_fallthru
        _
      %p669 = scmp.le.s32.totalorder 2, %s16
      // Predicated region
      $region53: #{tpu_custom_call.1} parent=5 // pred_check
        %p670 = pneg %p669
      $region54: #{tpu_custom_call.1} parent=5 // pred_check_branch
        %672 = sbr.rel (%p670) target = $region56
      $region55: #{tpu_custom_call.1} parent=5 // pred_region
        %s673 = ssub.s32 %s16, 2
        // Predicated region
        $region57: #{tpu_custom_call.1} parent=55 // pred_check
          %p674 = pneg %p197
        $region58: #{tpu_custom_call.1} parent=55 // pred_check_branch
          %676 = sbr.rel (%p674) target = $region60
        $region59: #{tpu_custom_call.1} parent=55 // pred_region
          %s677 = sand.u32 %s182, 1
          %s678 = scalar_lea.sflag [#allocation3], %s677
          %s679 = sand.u32 %s182, 1
          %s680 = smul.addr %s679, 8
          %s681 = scalar_lea.vmem [#allocation2], %s680
          %682 = dma.done %s678, 128
        $region60: #{tpu_custom_call.1} parent=55 // pred_fallthru
          _
      $region56: #{tpu_custom_call.1} parent=5 // pred_fallthru
        _
    $region6: #{tpu_custom_call.1} parent=1 // loop_footer
      %s20 = sadd.s32 1, %s16
    $region7: #{tpu_custom_call.1} parent=1 // loop_footer_branch
      %15 = sbr.rel target = $region3
    $region8: #{tpu_custom_call.1} parent=1 // loop_exit
      _
    %683 = vsyncpa [#allocation3], 1
    %s684 = scalar_lea.sflag [#allocation3], 1
    %685 = vsyncpa %s684, 1

// kernel: tpu_custom_call.1
$region0: #{tpu_custom_call.1}
  #allocation0 [shape = 'u32[]', space=smem, size = 0x4, offset = 0x4, fixed_abs, tag = 'smem constant byte address 0x4 - core index']
  #allocation1 [shape = 'u32[144,128]{1,0:T(1,128)}', space=vmem, size = 0x12000, scoped, tag = 'internal scratch']
  %s0 = inlined_call_operand.vmem [shape: f32[4,512], index: 0, kind: input, shape index: {}]
  %s1 = inlined_call_operand.vmem [shape: f32[32,4], index: 1, kind: input, shape index: {}]
  %s2 = inlined_call_operand.vmem [shape: f32[32,1], index: 2, kind: input, shape index: {}]
  %s3 = inlined_call_operand.vmem [shape: f32[32,32], index: 3, kind: input, shape index: {}]
  %s4 = inlined_call_operand.vmem [shape: f32[32,1], index: 4, kind: input, shape index: {}]
  %s5 = inlined_call_operand.vmem [shape: f32[4,32], index: 5, kind: input, shape index: {}]
  %s6 = inlined_call_operand.vmem [shape: f32[4,1], index: 6, kind: input, shape index: {}]
  %s7 = inlined_call_operand.hbm [shape: f32[4,512], index: 7, kind: output, shape index: {}]
  %s8 = sld [smem:[#allocation0]]
  $region61: #{tpu_custom_call.1} parent=0
    _
  %s10 = ssub.s32 1, %s8
  %s11 = scalar_select 0, %s10, %s8
  $region1: #{tpu_custom_call.1} parent=0
    #allocation2 [shape = 'u8[8192]{0}', space=vmem, size = 0x2000, scoped, tag = 'output window, operand 0']
    #allocation3 [shape = 's32[2]{0}', space=sflag, size = 0x8, scoped, tag = 'scoped memory for tpu_custom_call.1']
    %12 = vsyncpa [#allocation3], 0
    %s13 = scalar_lea.sflag [#allocation3], 1
    %14 = vsyncpa %s13, 0
    loop: start=0, step=1, limit=4
    $region2: #{tpu_custom_call.1} parent=1 // loop_pre_header
      _
    $region3: #{tpu_custom_call.1} parent=1 // loop_header
      %s16 = sphi 0, %s20
      %p17 = scmp.ge.s32.totalorder %s16, 4
      %s26 = sphi 0, %s28
      %s29 = sphi 0, %s26
      %s30 = sphi 0, %s29
      %s46 = sphi 0, %s30
      %s50 = sphi 0, %s50
      %s52 = sphi 0, %s50
      %s53 = sphi 0, %s52
      %s67 = sphi 0, %s53
      %s71 = sphi 0, %s71
      %s73 = sphi 0, %s71
      %s74 = sphi 0, %s73
      %s88 = sphi 0, %s74
      %s92 = sphi 0, %s92
      %s94 = sphi 0, %s92
      %s95 = sphi 0, %s94
      %s109 = sphi 0, %s95
      %s113 = sphi 0, %s113
      %s115 = sphi 0, %s113
      %s116 = sphi 0, %s115
      %s130 = sphi 0, %s116
      %s134 = sphi 0, %s134
      %s136 = sphi 0, %s134
      %s137 = sphi 0, %s136
      %s151 = sphi 0, %s137
      %s155 = sphi 0, %s155
      %s157 = sphi 0, %s155
      %s158 = sphi 0, %s157
      %s172 = sphi 0, %s158
      %s178 = sphi 0, %s180
      %s181 = sphi 0, %s178
      %s182 = sphi 0, %s181
      %s198 = sphi 0, %s182
    $region4: #{tpu_custom_call.1} parent=1 // loop_header_branch
      %19 = sbr.rel (%p17) target = $region8
    $region5: #{tpu_custom_call.1} parent=1 // loop_body
      %s21 = ssub.s32 %s16, 1
      %s22 = ssub.s32 %s16, 2
      %s23 = sadd.s32 %s16, 1
      %s24 = ssub.s32 %s16, %s23
      %p25 = scmp.eq.s32.totalorder %s24, 0
      %s27 = sadd.s32 %s26, 1
      %s28 = scalar_select %p25, %s26, %s27
      %p31 = pneg %p25
      %p32 = scmp.eq.s32.totalorder %s16, 1
      %p33 = por %p31, %p32
      %p34 = scmp.ne.s32.totalorder %s26, %s29
      %p35 = scmp.eq.s32.totalorder %s16, 0
      %p36 = por %p34, %p35
      %p37 = scmp.ne.s32.totalorder %s26, %s29
      %p38 = scmp.eq.s32.totalorder %s21, 1
      %p39 = por %p37, %p38
      %p40 = scmp.ne.s32.totalorder %s29, %s30
      %p41 = scmp.eq.s32.totalorder %s21, 0
      %p42 = por %p40, %p41
      %p43 = scmp.ne.s32.totalorder %s29, %s30
      %p44 = scmp.eq.s32.totalorder %s22, 1
      %p45 = por %p43, %p44
      %p47 = scmp.ne.s32.totalorder %s30, %s46
      %p48 = scmp.eq.s32.totalorder %s22, 0
      %p49 = por %p47, %p48
      %s51 = sadd.s32 %s50, 1
      %p54 = scmp.eq.s32.totalorder %s16, 1
      %p55 = scmp.ne.s32.totalorder %s50, %s52
      %p56 = scmp.eq.s32.totalorder %s16, 0
      %p57 = por %p55, %p56
      %p58 = scmp.ne.s32.totalorder %s50, %s52
      %p59 = scmp.eq.s32.totalorder %s21, 1
      %p60 = por %p58, %p59
      %p61 = scmp.ne.s32.totalorder %s52, %s53
      %p62 = scmp.eq.s32.totalorder %s21, 0
      %p63 = por %p61, %p62
      %p64 = scmp.ne.s32.totalorder %s52, %s53
      %p65 = scmp.eq.s32.totalorder %s22, 1
      %p66 = por %p64, %p65
      %p68 = scmp.ne.s32.totalorder %s53, %s67
      %p69 = scmp.eq.s32.totalorder %s22, 0
      %p70 = por %p68, %p69
      %s72 = sadd.s32 %s71, 1
      %p75 = scmp.eq.s32.totalorder %s16, 1
      %p76 = scmp.ne.s32.totalorder %s71, %s73
      %p77 = scmp.eq.s32.totalorder %s16, 0
      %p78 = por %p76, %p77
      %p79 = scmp.ne.s32.totalorder %s71, %s73
      %p80 = scmp.eq.s32.totalorder %s21, 1
      %p81 = por %p79, %p80
      %p82 = scmp.ne.s32.totalorder %s73, %s74
      %p83 = scmp.eq.s32.totalorder %s21, 0
      %p84 = por %p82, %p83
      %p85 = scmp.ne.s32.totalorder %s73, %s74
      %p86 = scmp.eq.s32.totalorder %s22, 1
      %p87 = por %p85, %p86
      %p89 = scmp.ne.s32.totalorder %s74, %s88
      %p90 = scmp.eq.s32.totalorder %s22, 0
      %p91 = por %p89, %p90
      %s93 = sadd.s32 %s92, 1
      %p96 = scmp.eq.s32.totalorder %s16, 1
      %p97 = scmp.ne.s32.totalorder %s92, %s94
      %p98 = scmp.eq.s32.totalorder %s16, 0
      %p99 = por %p97, %p98
      %p100 = scmp.ne.s32.totalorder %s92, %s94
      %p101 = scmp.eq.s32.totalorder %s21, 1
      %p102 = por %p100, %p101
      %p103 = scmp.ne.s32.totalorder %s94, %s95
      %p104 = scmp.eq.s32.totalorder %s21, 0
      %p105 = por %p103, %p104
      %p106 = scmp.ne.s32.totalorder %s94, %s95
      %p107 = scmp.eq.s32.totalorder %s22, 1
      %p108 = por %p106, %p107
      %p110 = scmp.ne.s32.totalorder %s95, %s109
      %p111 = scmp.eq.s32.totalorder %s22, 0
      %p112 = por %p110, %p111
      %s114 = sadd.s32 %s113, 1
      %p117 = scmp.eq.s32.totalorder %s16, 1
      %p118 = scmp.ne.s32.totalorder %s113, %s115
      %p119 = scmp.eq.s32.totalorder %s16, 0
      %p120 = por %p118, %p119
      %p121 = scmp.ne.s32.totalorder %s113, %s115
      %p122 = scmp.eq.s32.totalorder %s21, 1
      %p123 = por %p121, %p122
      %p124 = scmp.ne.s32.totalorder %s115, %s116
      %p125 = scmp.eq.s32.totalorder %s21, 0
      %p126 = por %p124, %p125
      %p127 = scmp.ne.s32.totalorder %s115, %s116
      %p128 = scmp.eq.s32.totalorder %s22, 1
      %p129 = por %p127, %p128
      %p131 = scmp.ne.s32.totalorder %s116, %s130
      %p132 = scmp.eq.s32.totalorder %s22, 0
      %p133 = por %p131, %p132
      %s135 = sadd.s32 %s134, 1
      %p138 = scmp.eq.s32.totalorder %s16, 1
      %p139 = scmp.ne.s32.totalorder %s134, %s136
      %p140 = scmp.eq.s32.totalorder %s16, 0
      %p141 = por %p139, %p140
      %p142 = scmp.ne.s32.totalorder %s134, %s136
      %p143 = scmp.eq.s32.totalorder %s21, 1
      %p144 = por %p142, %p143
      %p145 = scmp.ne.s32.totalorder %s136, %s137
      %p146 = scmp.eq.s32.totalorder %s21, 0
      %p147 = por %p145, %p146
      %p148 = scmp.ne.s32.totalorder %s136, %s137
      %p149 = scmp.eq.s32.totalorder %s22, 1
      %p150 = por %p148, %p149
      %p152 = scmp.ne.s32.totalorder %s137, %s151
      %p153 = scmp.eq.s32.totalorder %s22, 0
      %p154 = por %p152, %p153
      %s156 = sadd.s32 %s155, 1
      %p159 = scmp.eq.s32.totalorder %s16, 1
      %p160 = scmp.ne.s32.totalorder %s155, %s157
      %p161 = scmp.eq.s32.totalorder %s16, 0
      %p162 = por %p160, %p161
      %p163 = scmp.ne.s32.totalorder %s155, %s157
      %p164 = scmp.eq.s32.totalorder %s21, 1
      %p165 = por %p163, %p164
      %p166 = scmp.ne.s32.totalorder %s157, %s158
      %p167 = scmp.eq.s32.totalorder %s21, 0
      %p168 = por %p166, %p167
      %p169 = scmp.ne.s32.totalorder %s157, %s158
      %p170 = scmp.eq.s32.totalorder %s22, 1
      %p171 = por %p169, %p170
      %p173 = scmp.ne.s32.totalorder %s158, %s172
      %p174 = scmp.eq.s32.totalorder %s22, 0
      %p175 = por %p173, %p174
      %s176 = ssub.s32 %s16, %s23
      %p177 = scmp.eq.s32.totalorder %s176, 0
      %s179 = sadd.s32 %s178, 1
      %s180 = scalar_select %p177, %s178, %s179
      %p183 = pneg %p177
      %p184 = scmp.eq.s32.totalorder %s16, 1
      %p185 = por %p183, %p184
      %p186 = scmp.ne.s32.totalorder %s178, %s181
      %p187 = scmp.eq.s32.totalorder %s16, 0
      %p188 = por %p186, %p187
      %p189 = scmp.ne.s32.totalorder %s178, %s181
      %p190 = scmp.eq.s32.totalorder %s21, 1
      %p191 = por %p189, %p190
      %p192 = scmp.ne.s32.totalorder %s181, %s182
      %p193 = scmp.eq.s32.totalorder %s21, 0
      %p194 = por %p192, %p193
      %p195 = scmp.ne.s32.totalorder %s181, %s182
      %p196 = scmp.eq.s32.totalorder %s22, 1
      %p197 = por %p195, %p196
      %p199 = scmp.ne.s32.totalorder %s182, %s198
      %p200 = scmp.eq.s32.totalorder %s22, 0
      %p201 = por %p199, %p200
      %p202 = scmp.le.s32.totalorder 1, %s16
      %p203 = scmp.lt.s32.totalorder %s16, 3
      %p204 = pnand %p202, %p203
      %p205 = pneg %p204
      // Predicated region
      $region9: #{tpu_custom_call.1} parent=5 // pred_check
        _
      $region10: #{tpu_custom_call.1} parent=5 // pred_check_branch
        %207 = sbr.rel (%p204) target = $region12
      $region11: #{tpu_custom_call.1} parent=5 // pred_region
        %s208 = ssub.s32 %s16, 1
        // Predicated region
        $region13: #{tpu_custom_call.1} parent=11 // pred_check
          %p209 = pneg %p63
        $region14: #{tpu_custom_call.1} parent=11 // pred_check_branch
          %211 = sbr.rel (%p209) target = $region16
        $region15: #{tpu_custom_call.1} parent=11 // pred_region
          _
        $region16: #{tpu_custom_call.1} parent=11 // pred_fallthru
          _
        // Predicated region
        $region17: #{tpu_custom_call.1} parent=11 // pred_check
          %p212 = pneg %p84
        $region18: #{tpu_custom_call.1} parent=11 // pred_check_branch
          %214 = sbr.rel (%p212) target = $region20
        $region19: #{tpu_custom_call.1} parent=11 // pred_region
          _
        $region20: #{tpu_custom_call.1} parent=11 // pred_fallthru
          _
        // Predicated region
        $region21: #{tpu_custom_call.1} parent=11 // pred_check
          %p215 = pneg %p105
        $region22: #{tpu_custom_call.1} parent=11 // pred_check_branch
          %217 = sbr.rel (%p215) target = $region24
        $region23: #{tpu_custom_call.1} parent=11 // pred_region
          _
        $region24: #{tpu_custom_call.1} parent=11 // pred_fallthru
          _
        // Predicated region
        $region25: #{tpu_custom_call.1} parent=11 // pred_check
          %p218 = pneg %p126
        $region26: #{tpu_custom_call.1} parent=11 // pred_check_branch
          %220 = sbr.rel (%p218) target = $region28
        $region27: #{tpu_custom_call.1} parent=11 // pred_region
          _
        $region28: #{tpu_custom_call.1} parent=11 // pred_fallthru
          _
        // Predicated region
        $region29: #{tpu_custom_call.1} parent=11 // pred_check
          %p221 = pneg %p147
        $region30: #{tpu_custom_call.1} parent=11 // pred_check_branch
          %223 = sbr.rel (%p221) target = $region32
        $region31: #{tpu_custom_call.1} parent=11 // pred_region
          _
        $region32: #{tpu_custom_call.1} parent=11 // pred_fallthru
          _
        // Predicated region
        $region33: #{tpu_custom_call.1} parent=11 // pred_check
          %p224 = pneg %p168
        $region34: #{tpu_custom_call.1} parent=11 // pred_check_branch
          %226 = sbr.rel (%p224) target = $region36
        $region35: #{tpu_custom_call.1} parent=11 // pred_region
          _
        $region36: #{tpu_custom_call.1} parent=11 // pred_fallthru
          _
      $region12: #{tpu_custom_call.1} parent=5 // pred_fallthru
        _
      %p227 = scmp.lt.s32.totalorder %s16, 2
      // Predicated region
      $region37: #{tpu_custom_call.1} parent=5 // pred_check
        %p228 = pneg %p227
      $region38: #{tpu_custom_call.1} parent=5 // pred_check_branch
        %230 = sbr.rel (%p228) target = $region40
      $region39: #{tpu_custom_call.1} parent=5 // pred_region
        // Predicated region
        $region41: #{tpu_custom_call.1} parent=39 // pred_check
          %p231 = pneg %p36
        $region42: #{tpu_custom_call.1} parent=39 // pred_check_branch
          %233 = sbr.rel (%p231) target = $region44
        $region43: #{tpu_custom_call.1} parent=39 // pred_region
          %s234 = smul.u32 2, %s16
          %p235 = scmp.lt.s32.totalorder %s234, 3
          %s236 = scalar_select %p235, %s234, 3
          %s237 = smul.addr %s236, 4
          %s238 = scalar_lea.vmem %s0, %s237
          %s239 = smul.u32 2, %s16
        $region44: #{tpu_custom_call.1} parent=39 // pred_fallthru
          _
      $region40: #{tpu_custom_call.1} parent=5 // pred_fallthru
        _
      %p240 = scmp.le.s32.totalorder 1, %s16
      %p241 = scmp.lt.s32.totalorder %s16, 3
      %p242 = pnand %p240, %p241
      %p243 = pneg %p242
      // Predicated region
      $region45: #{tpu_custom_call.1} parent=5 // pred_check
        _
      $region46: #{tpu_custom_call.1} parent=5 // pred_check_branch
        %245 = sbr.rel (%p242) target = $region48
      $region47: #{tpu_custom_call.1} parent=5 // pred_region
        %s246 = ssub.s32 %s16, 1
        %s247 = smul.u32 2, %s21
        %p248 = scmp.lt.s32.totalorder %s247, 3
        %s249 = scalar_select %p248, %s247, 3
        %s250 = smul.addr %s249, 4
        %s251 = scalar_lea.vmem %s0, %s250
        %p252 = pneg %p42
        %p253 = pneg %p39
        %p254 = pneg %p63
        %p255 = pneg %p60
        %p256 = pneg %p84
        %p257 = pneg %p81
        %p258 = pneg %p105
        %p259 = pneg %p102
        %p260 = pneg %p126
        %p261 = pneg %p123
        %p262 = pneg %p147
        %p263 = pneg %p144
        %p264 = pneg %p168
        %p265 = pneg %p165
        %p266 = pneg %p194
        %p267 = pneg %p191
        %s268 = sand.u32 %s181, 1
        %s269 = scalar_lea.sflag [#allocation3], %s268
        %s270 = sand.u32 %s181, 1
        %s271 = smul.addr %s270, 8
        %s272 = scalar_lea.vmem [#allocation2], %s271
        %s273 = smul.u32 2, %s21
        %p274 = scmp.lt.s32.totalorder %s273, 3
        %s275 = scalar_select %p274, %s273, 3
        %s276 = smul.addr %s275, 4
        %s277 = scalar_lea.vmem %s0, %s276
        %s278 = smul.u32 2, %s21
        %s279 = smul.u32 2, %s21
        %v280 = vld [vmem:[%s277] sm:$0xff]
        %v281 = vld [vmem:[%s1] sm:$0xff]
        %v282 = vld [vmem:[%s1 + $0x8] sm:$0xff]
        %v283 = vld [vmem:[%s1 + $0x10] sm:$0xff]
        %v284 = vld [vmem:[%s1 + $0x18] sm:$0xff]
        %v285 = vld [vmem:[%s2] sm:$0xff]
        %v286 = vld [vmem:[%s2 + $0x8] sm:$0xff]
        %v287 = vld [vmem:[%s2 + $0x10] sm:$0xff]
        %v288 = vld [vmem:[%s2 + $0x18] sm:$0xff]
        %290 = vset.pattern.permute.xlu0 0
        %291 = vperm.xlu0 %290, %v285
        %v292 = vpop.permute.xlu0 %291
        %295 = vset.pattern.permute.xlu0 0
        %296 = vperm.xlu0 %295, %v286
        %v297 = vpop.permute.xlu0 %296
        %300 = vset.pattern.permute.xlu0 0
        %301 = vperm.xlu0 %300, %v287
        %v302 = vpop.permute.xlu0 %301
        %305 = vset.pattern.permute.xlu0 0
        %306 = vperm.xlu0 %305, %v288
        %v307 = vpop.permute.xlu0 %306
        %v310 = vcombine.high %v280, %v280
        %vm311 = vcmask 31744
        %v313 = vsel %vm311, %v281, 0
        %v316 = vsel %vm311, %v282, 0
        %v319 = vsel %vm311, %v283, 0
        %v322 = vsel %vm311, %v284, 0
        %vm324 = vcmask 1043456
        %v325 = vsel %vm324, %v280, 0
        %v327 = vsel %vm324, %v310, 0
        %329 = vmatprep.subr.mxu0 %v327
        %330 = vmatpush1.msra.mxu0 %v325
        %331 = vmatprep.subr.mxu0 0.0
        %332 = vmatpush1.msra.mxu0 0.0
        %333 = vmatprep.subr.mxu0 0.0
        %334 = vmatpush1.msra.mxu0 0.0
        %335 = vmatprep.subr.mxu0 0.0
        %336 = vmatpush1.msra.mxu0 0.0
        %337 = vmatprep.subr.mxu0 0.0
        %338 = vmatpush1.msra.mxu0 0.0
        %339 = vmatprep.subr.mxu0 0.0
        %340 = vmatpush1.msra.mxu0 0.0
        %341 = vmatprep.subr.mxu0 0.0
        %342 = vmatpush1.msra.mxu0 0.0
        %343 = vmatprep.subr.mxu0 0.0
        %344 = vmatpush1.msra.mxu0 0.0
        %345 = vmatprep.subr.mxu0 0.0
        %346 = vmatpush1.msra.mxu0 0.0
        %347 = vmatprep.subr.mxu0 0.0
        %348 = vmatpush1.msra.mxu0 0.0
        %349 = vmatprep.subr.mxu0 0.0
        %350 = vmatpush1.msra.mxu0 0.0
        %351 = vmatprep.subr.mxu0 0.0
        %352 = vmatpush1.msra.mxu0 0.0
        %353 = vmatprep.subr.mxu0 0.0
        %354 = vmatpush1.msra.mxu0 0.0
        %355 = vmatprep.subr.mxu0 0.0
        %356 = vmatpush1.msra.mxu0 0.0
        %357 = vmatprep.subr.mxu0 0.0
        %358 = vmatpush1.msra.mxu0 0.0
        %359 = vmatprep.subr.mxu0 0.0
        %360 = vmatpush1.msra.mxu0 0.0
        %361 = vmatprep.subr.mxu0 0.0
        %362 = vmatpush1.msra.mxu0 0.0
        %363 = vmatprep.subr.mxu0 0.0
        %364 = vmatpush1.msra.mxu0 0.0
        %365 = vmatprep.subr.mxu0 0.0
        %366 = vmatpush1.msra.mxu0 0.0
        %367 = vmatprep.subr.mxu0 0.0
        %368 = vmatpush1.msra.mxu0 0.0
        %369 = vmatprep.subr.mxu0 0.0
        %370 = vmatpush1.msra.mxu0 0.0
        %371 = vmatprep.subr.mxu0 0.0
        %372 = vmatpush1.msra.mxu0 0.0
        %373 = vmatprep.subr.mxu0 0.0
        %374 = vmatpush1.msra.mxu0 0.0
        %375 = vmatprep.subr.mxu0 0.0
        %376 = vmatpush1.msra.mxu0 0.0
        %377 = vmatprep.subr.mxu0 0.0
        %378 = vmatpush1.msra.mxu0 0.0
        %379 = vmatprep.subr.mxu0 0.0
        %380 = vmatpush1.msra.mxu0 0.0
        %381 = vmatprep.subr.mxu0 0.0
        %382 = vmatpush1.msra.mxu0 0.0
        %383 = vmatprep.subr.mxu0 0.0
        %384 = vmatpush1.msra.mxu0 0.0
        %385 = vmatprep.subr.mxu0 0.0
        %386 = vmatpush1.msra.mxu0 0.0
        %387 = vmatprep.subr.mxu0 0.0
        %388 = vmatpush1.msra.mxu0 0.0
        %389 = vmatprep.subr.mxu0 0.0
        %390 = vmatpush1.msra.mxu0 0.0
        %391 = vmatprep.subr.mxu0 0.0
        %392 = vmatpush1.msra.mxu0 0.0
        %393 = vmatprep.mubr.f32.mxu0 0.0
        %394 = vmatmul.mubr.f32.gmra.mrb[0].mxu0 %v313
        %v395 = vpop.f32.mrb[0].mxu0
        %v396 = vadd.f32 %v292, %v395
        %v397 = vpop.f32.mrb[0].mxu0
        %v398 = vadd.f32 %v292, %v397
        %399 = vmatprep.mubr.f32.mxu0 0.0
        %400 = vmatmul.mubr.f32.gmra.mrb[0].mxu0 %v316
        %v401 = vpop.f32.mrb[0].mxu0
        %v402 = vadd.f32 %v297, %v401
        %v403 = vpop.f32.mrb[0].mxu0
        %v404 = vadd.f32 %v297, %v403
        %405 = vmatprep.mubr.f32.mxu0 0.0
        %406 = vmatmul.mubr.f32.gmra.mrb[0].mxu0 %v319
        %v407 = vpop.f32.mrb[0].mxu0
        %v408 = vadd.f32 %v302, %v407
        %v409 = vpop.f32.mrb[0].mxu0
        %v410 = vadd.f32 %v302, %v409
        %411 = vmatprep.mubr.f32.mxu0 0.0
        %412 = vmatmul.mubr.f32.gmra.mrb[0].mxu0 %v322
        %v413 = vpop.f32.mrb[0].mxu0
        %v414 = vadd.f32 %v307, %v413
        %v415 = vpop.f32.mrb[0].mxu0
        %v416 = vadd.f32 %v307, %v415
        %417 = vdwg.mxu0
        %v418 = vmax.f32 %v396, 0.0
        %v419 = vmax.f32 %v398, 0.0
        %v420 = vmax.f32 %v402, 0.0
        %v421 = vmax.f32 %v404, 0.0
        %v422 = vmax.f32 %v408, 0.0
        %v423 = vmax.f32 %v410, 0.0
        %v424 = vmax.f32 %v414, 0.0
        %v425 = vmax.f32 %v416, 0.0
        %v426 = vld [vmem:[%s3] sm:$0xff]
        %v427 = vld [vmem:[%s3 + $0x8] sm:$0xff]
        %v428 = vld [vmem:[%s3 + $0x10] sm:$0xff]
        %v429 = vld [vmem:[%s3 + $0x18] sm:$0xff]
        %v430 = vld [vmem:[%s4] sm:$0xff]
        %v431 = vld [vmem:[%s4 + $0x8] sm:$0xff]
        %v432 = vld [vmem:[%s4 + $0x10] sm:$0xff]
        %v433 = vld [vmem:[%s4 + $0x18] sm:$0xff]
        %435 = vset.pattern.permute.xlu0 0
        %436 = vperm.xlu0 %435, %v430
        %v437 = vpop.permute.xlu0 %436
        %440 = vset.pattern.permute.xlu0 0
        %441 = vperm.xlu0 %440, %v431
        %v442 = vpop.permute.xlu0 %441
        %445 = vset.pattern.permute.xlu0 0
        %446 = vperm.xlu0 %445, %v432
        %v447 = vpop.permute.xlu0 %446
        %450 = vset.pattern.permute.xlu0 0
        %451 = vperm.xlu0 %450, %v433
        %v452 = vpop.permute.xlu0 %451
        %vm454 = vcmask 261120
        %v456 = vsel %vm454, %v426, 0
        %v459 = vsel %vm454, %v427, 0
        %v462 = vsel %vm454, %v428, 0
        %v465 = vsel %vm454, %v429, 0
        %467 = vmatprep.subr.mxu0 %v419
        %468 = vmatpush1.msra.mxu0 %v418
        %469 = vmatprep.subr.mxu0 %v421
        %470 = vmatpush1.msra.mxu0 %v420
        %471 = vmatprep.subr.mxu0 %v423
        %472 = vmatpush1.msra.mxu0 %v422
        %473 = vmatprep.subr.mxu0 %v425
        %474 = vmatpush1.msra.mxu0 %v424
        %475 = vmatprep.subr.mxu0 0.0
        %476 = vmatpush1.msra.mxu0 0.0
        %477 = vmatprep.subr.mxu0 0.0
        %478 = vmatpush1.msra.mxu0 0.0
        %479 = vmatprep.subr.mxu0 0.0
        %480 = vmatpush1.msra.mxu0 0.0
        %481 = vmatprep.subr.mxu0 0.0
        %482 = vmatpush1.msra.mxu0 0.0
        %483 = vmatprep.subr.mxu0 0.0
        %484 = vmatpush1.msra.mxu0 0.0
        %485 = vmatprep.subr.mxu0 0.0
        %486 = vmatpush1.msra.mxu0 0.0
        %487 = vmatprep.subr.mxu0 0.0
        %488 = vmatpush1.msra.mxu0 0.0
        %489 = vmatprep.subr.mxu0 0.0
        %490 = vmatpush1.msra.mxu0 0.0
        %491 = vmatprep.subr.mxu0 0.0
        %492 = vmatpush1.msra.mxu0 0.0
        %493 = vmatprep.subr.mxu0 0.0
        %494 = vmatpush1.msra.mxu0 0.0
        %495 = vmatprep.subr.mxu0 0.0
        %496 = vmatpush1.msra.mxu0 0.0
        %497 = vmatprep.subr.mxu0 0.0
        %498 = vmatpush1.msra.mxu0 0.0
        %499 = vmatprep.subr.mxu0 0.0
        %500 = vmatpush1.msra.mxu0 0.0
        %501 = vmatprep.subr.mxu0 0.0
        %502 = vmatpush1.msra.mxu0 0.0
        %503 = vmatprep.subr.mxu0 0.0
        %504 = vmatpush1.msra.mxu0 0.0
        %505 = vmatprep.subr.mxu0 0.0
        %506 = vmatpush1.msra.mxu0 0.0
        %507 = vmatprep.subr.mxu0 0.0
        %508 = vmatpush1.msra.mxu0 0.0
        %509 = vmatprep.subr.mxu0 0.0
        %510 = vmatpush1.msra.mxu0 0.0
        %511 = vmatprep.subr.mxu0 0.0
        %512 = vmatpush1.msra.mxu0 0.0
        %513 = vmatprep.subr.mxu0 0.0
        %514 = vmatpush1.msra.mxu0 0.0
        %515 = vmatprep.subr.mxu0 0.0
        %516 = vmatpush1.msra.mxu0 0.0
        %517 = vmatprep.subr.mxu0 0.0
        %518 = vmatpush1.msra.mxu0 0.0
        %519 = vmatprep.subr.mxu0 0.0
        %520 = vmatpush1.msra.mxu0 0.0
        %521 = vmatprep.subr.mxu0 0.0
        %522 = vmatpush1.msra.mxu0 0.0
        %523 = vmatprep.subr.mxu0 0.0
        %524 = vmatpush1.msra.mxu0 0.0
        %525 = vmatprep.subr.mxu0 0.0
        %526 = vmatpush1.msra.mxu0 0.0
        %527 = vmatprep.subr.mxu0 0.0
        %528 = vmatpush1.msra.mxu0 0.0
        %529 = vmatprep.subr.mxu0 0.0
        %530 = vmatpush1.msra.mxu0 0.0
        %531 = vmatprep.mubr.f32.mxu0 0.0
        %532 = vmatmul.mubr.f32.gmra.mrb[0].mxu0 %v456
        %v533 = vpop.f32.mrb[0].mxu0
        %v534 = vadd.f32 %v437, %v533
        %v535 = vpop.f32.mrb[0].mxu0
        %v536 = vadd.f32 %v437, %v535
        %537 = vmatprep.mubr.f32.mxu0 0.0
        %538 = vmatmul.mubr.f32.gmra.mrb[0].mxu0 %v459
        %v539 = vpop.f32.mrb[0].mxu0
        %v540 = vadd.f32 %v442, %v539
        %v541 = vpop.f32.mrb[0].mxu0
        %v542 = vadd.f32 %v442, %v541
        %543 = vmatprep.mubr.f32.mxu0 0.0
        %544 = vmatmul.mubr.f32.gmra.mrb[0].mxu0 %v462
        %v545 = vpop.f32.mrb[0].mxu0
        %v546 = vadd.f32 %v447, %v545
        %v547 = vpop.f32.mrb[0].mxu0
        %v548 = vadd.f32 %v447, %v547
        %549 = vmatprep.mubr.f32.mxu0 0.0
        %550 = vmatmul.mubr.f32.gmra.mrb[0].mxu0 %v465
        %v551 = vpop.f32.mrb[0].mxu0
        %v552 = vadd.f32 %v452, %v551
        %v553 = vpop.f32.mrb[0].mxu0
        %v554 = vadd.f32 %v452, %v553
        %555 = vdwg.mxu0
        %v556 = vmax.f32 %v534, 0.0
        %v557 = vmax.f32 %v536, 0.0
        %v558 = vmax.f32 %v540, 0.0
        %v559 = vmax.f32 %v542, 0.0
        %v560 = vmax.f32 %v546, 0.0
        %v561 = vmax.f32 %v548, 0.0
        %v562 = vmax.f32 %v552, 0.0
        %v563 = vmax.f32 %v554, 0.0
        %v564 = vld [vmem:[%s5] sm:$0xf]
        %v565 = vld [vmem:[%s6] sm:$0xf]
        %567 = vset.pattern.permute.xlu0 0
        %568 = vperm.xlu0 %567, %v565
        %v569 = vpop.permute.xlu0 %568
        %v572 = vsel %vm454, %v564, 0
        %574 = vmatprep.subr.mxu0 %v557
        %575 = vmatpush1.msra.mxu0 %v556
        %576 = vmatprep.subr.mxu0 %v559
        %577 = vmatpush1.msra.mxu0 %v558
        %578 = vmatprep.subr.mxu0 %v561
        %579 = vmatpush1.msra.mxu0 %v560
        %580 = vmatprep.subr.mxu0 %v563
        %581 = vmatpush1.msra.mxu0 %v562
        %582 = vmatprep.subr.mxu0 0.0
        %583 = vmatpush1.msra.mxu0 0.0
        %584 = vmatprep.subr.mxu0 0.0
        %585 = vmatpush1.msra.mxu0 0.0
        %586 = vmatprep.subr.mxu0 0.0
        %587 = vmatpush1.msra.mxu0 0.0
        %588 = vmatprep.subr.mxu0 0.0
        %589 = vmatpush1.msra.mxu0 0.0
        %590 = vmatprep.subr.mxu0 0.0
        %591 = vmatpush1.msra.mxu0 0.0
        %592 = vmatprep.subr.mxu0 0.0
        %593 = vmatpush1.msra.mxu0 0.0
        %594 = vmatprep.subr.mxu0 0.0
        %595 = vmatpush1.msra.mxu0 0.0
        %596 = vmatprep.subr.mxu0 0.0
        %597 = vmatpush1.msra.mxu0 0.0
        %598 = vmatprep.subr.mxu0 0.0
        %599 = vmatpush1.msra.mxu0 0.0
        %600 = vmatprep.subr.mxu0 0.0
        %601 = vmatpush1.msra.mxu0 0.0
        %602 = vmatprep.subr.mxu0 0.0
        %603 = vmatpush1.msra.mxu0 0.0
        %604 = vmatprep.subr.mxu0 0.0
        %605 = vmatpush1.msra.mxu0 0.0
        %606 = vmatprep.subr.mxu0 0.0
        %607 = vmatpush1.msra.mxu0 0.0
        %608 = vmatprep.subr.mxu0 0.0
        %609 = vmatpush1.msra.mxu0 0.0
        %610 = vmatprep.subr.mxu0 0.0
        %611 = vmatpush1.msra.mxu0 0.0
        %612 = vmatprep.subr.mxu0 0.0
        %613 = vmatpush1.msra.mxu0 0.0
        %614 = vmatprep.subr.mxu0 0.0
        %615 = vmatpush1.msra.mxu0 0.0
        %616 = vmatprep.subr.mxu0 0.0
        %617 = vmatpush1.msra.mxu0 0.0
        %618 = vmatprep.subr.mxu0 0.0
        %619 = vmatpush1.msra.mxu0 0.0
        %620 = vmatprep.subr.mxu0 0.0
        %621 = vmatpush1.msra.mxu0 0.0
        %622 = vmatprep.subr.mxu0 0.0
        %623 = vmatpush1.msra.mxu0 0.0
        %624 = vmatprep.subr.mxu0 0.0
        %625 = vmatpush1.msra.mxu0 0.0
        %626 = vmatprep.subr.mxu0 0.0
        %627 = vmatpush1.msra.mxu0 0.0
        %628 = vmatprep.subr.mxu0 0.0
        %629 = vmatpush1.msra.mxu0 0.0
        %630 = vmatprep.subr.mxu0 0.0
        %631 = vmatpush1.msra.mxu0 0.0
        %632 = vmatprep.subr.mxu0 0.0
        %633 = vmatpush1.msra.mxu0 0.0
        %634 = vmatprep.subr.mxu0 0.0
        %635 = vmatpush1.msra.mxu0 0.0
        %636 = vmatprep.subr.mxu0 0.0
        %637 = vmatpush1.msra.mxu0 0.0
        %638 = vmatprep.mubr.f32.mxu0 0.0
        %639 = vmatmul.mubr.f32.gmra.mrb[0].mxu0 %v572
        %v640 = vpop.f32.mrb[0].mxu0
        %v641 = vadd.f32 %v569, %v640
        %v642 = vpop.f32.mrb[0].mxu0
        %v643 = vadd.f32 %v569, %v642
        %644 = vdwg.mxu0
        %v647 = vcombine.low %v641, %v643
        %649 = vst [vmem:[%s272] sm:$0xff] %v647
        %s650 = sand.u32 %s181, 1
        %s651 = scalar_lea.sflag [#allocation3], %s650
        %s652 = sand.u32 %s181, 1
        %s653 = smul.addr %s652, 8
        %s654 = scalar_lea.vmem [#allocation2], %s653
        // Predicated region
        $region49: #{tpu_custom_call.1} parent=47 // pred_check
          %p655 = pneg %p191
        $region50: #{tpu_custom_call.1} parent=47 // pred_check_branch
          %657 = sbr.rel (%p655) target = $region52
        $region51: #{tpu_custom_call.1} parent=47 // pred_region
          %s658 = smul.u32 2, %s21
          %s660 = ssub.s32 128, 128
          %661 = vsyncadd %s651, %s660
          %s662 = smul.addr %s658, 64
          %s663 = scalar_lea.hbm %s7, %s662
          %s665 = sshll.u32 %s654, 4
          %s666 = int_to_ptr.vmem [resolvable:$true] %s665
          %668 = dma.vmem_to_hbm [thread:$0]  %s666, 128, %s663, %s651
        $region52: #{tpu_custom_call.1} parent=47 // pred_fallthru
          _
      $region48: #{tpu_custom_call.1} parent=5 // pred_fallthru
        _
      %p669 = scmp.le.s32.totalorder 2, %s16
      // Predicated region
      $region53: #{tpu_custom_call.1} parent=5 // pred_check
        %p670 = pneg %p669
      $region54: #{tpu_custom_call.1} parent=5 // pred_check_branch
        %672 = sbr.rel (%p670) target = $region56
      $region55: #{tpu_custom_call.1} parent=5 // pred_region
        %s673 = ssub.s32 %s16, 2
        // Predicated region
        $region57: #{tpu_custom_call.1} parent=55 // pred_check
          %p674 = pneg %p197
        $region58: #{tpu_custom_call.1} parent=55 // pred_check_branch
          %676 = sbr.rel (%p674) target = $region60
        $region59: #{tpu_custom_call.1} parent=55 // pred_region
          %s677 = sand.u32 %s182, 1
          %s678 = scalar_lea.sflag [#allocation3], %s677
          %s679 = sand.u32 %s182, 1
          %s680 = smul.addr %s679, 8
          %s681 = scalar_lea.vmem [#allocation2], %s680
          %682 = dma.done %s678, 128
        $region60: #{tpu_custom_call.1} parent=55 // pred_fallthru
          _
      $region56: #{tpu_custom_call.1} parent=5 // pred_fallthru
        _
    $region6: #{tpu_custom_call.1} parent=1 // loop_footer
      %s20 = sadd.s32 1, %s16
    $region7: #{tpu_custom_call.1} parent=1 // loop_footer_branch
      %15 = sbr.rel target = $region3
    $region8: #{tpu_custom_call.1} parent=1 // loop_exit
      _
    %683 = vsyncpa [#allocation3], 1
    %s684 = scalar_lea.sflag [#allocation3], 1
    %685 = vsyncpa %s684, 1

</llo_original>
